<compile_context>
chip_gen: v7x
topology: tpu7x:2x2x1
jax: 0.10.0
libtpu: 0.0.40
codegen_flags: <defaults>
</compile_context>

<pallas_src>
import jax
import jax.numpy as jnp
from jax.experimental import pallas as pl
from jax.experimental.pallas import tpu as pltpu


def _mlp_kernel(x_ref, w1_ref, b1_ref, w2_ref, b2_ref, w3_ref, b3_ref, o_ref):
    """One batch tile of the fused 3-layer MLP (bf16 MXU, f32 accumulation)."""
    # Layer 1: Linear + ReLU
    h1 = jnp.dot(x_ref[...], w1_ref[...], preferred_element_type=jnp.float32)
    h1 = jnp.maximum(h1 + b1_ref[...], 0.0)          # (1, fc1) bias broadcast

    # Layer 2: Linear + ReLU
    h2 = jnp.dot(h1.astype(w2_ref.dtype), w2_ref[...],
                 preferred_element_type=jnp.float32)
    h2 = jnp.maximum(h2 + b2_ref[...], 0.0)

    # Layer 3: Linear (no activation)
    out = jnp.dot(h2.astype(w3_ref.dtype), w3_ref[...],
                  preferred_element_type=jnp.float32)
    o_ref[...] = (out + b3_ref[...]).astype(o_ref.dtype)


def _round_up(x, m):
    return ((x + m - 1) // m) * m


def _pick_batch_tile(batch, max_tm):
    """16-aligned batch tile; guarantees >=2 grid steps when batch > 16.

    - bf16 vregs pack [16,128], so tiles are multiples of 16 (128/256 when big).
    - When batch fits under max_tm we still split into >=2 tiles so both v7x
      TensorCores get work via dimension_semantics=("parallel",).
    - Clamped to >=16 so tiny max_tm can never produce a 0-sized tile.
    """
    cap = max(16, max_tm - (max_tm % 16))
    if batch <= 16:
        return batch                       # block == full array -> always legal
    if batch <= cap:
        # Split into at least 2 tiles (last tile may be OOB-padded; rows are
        # independent so padding is safe).
        return _round_up(pl.cdiv(batch, 2), 16)
    tm = cap
    if tm >= 256:
        tm -= tm % 256                     # MXU-friendly streaming on v6e/v7x
    elif tm >= 128:
        tm -= tm % 128                     # v5e MXU is 128x128
    return tm


def _vmem_capacity_bytes():
    """Physical VMEM per TensorCore; conservative fallback if query fails."""
    try:
        cap = getattr(pltpu.get_tpu_info(), "vmem_capacity_bytes", None)
        if cap:
            return int(cap)
    except Exception:
        pass
    return 64 * 1024 * 1024                # v7x per-TC minimum


def _build_forward(x, weights, tm, grid, out_size, vmem_limit, cost_estimate,
                   single_buffer_weights):
    in_size = x.shape[1]

    def resident(a):
        # Constant index_map: the same block every grid step. With
        # Buffered(1) Pallas keeps exactly one copy in VMEM (no pointless
        # double buffer for data that never changes).
        if single_buffer_weights:
            return pl.BlockSpec(a.shape, lambda i: (0,) * a.ndim,
                                pipeline_mode=pl.Buffered(1))
        return pl.BlockSpec(a.shape, lambda i: (0,) * a.ndim)

    return pl.pallas_call(
        _mlp_kernel,
        out_shape=jax.ShapeDtypeStruct((x.shape[0], out_size), jnp.float32),
        grid=grid,
        in_specs=[pl.BlockSpec((tm, in_size), lambda i: (i, 0))]
                 + [resident(a) for a in weights],
        out_specs=pl.BlockSpec((tm, out_size), lambda i: (i, 0)),
        compiler_params=pltpu.CompilerParams(
            dimension_semantics=("parallel",),   # megacore sharding on v7x
            vmem_limit_bytes=vmem_limit,
        ),
        cost_estimate=cost_estimate,
    )


def text_model_forward(x, params, *, max_tm=1024):
    """Fused forward pass of Text_Model on TPU via a single Pallas kernel.

    x      : (batch, input_size), any float dtype (cast to the weight dtype)
    params : dict with w1 (in, fc1) bf16, b1 (1, fc1) f32, w2 (fc1, fc2) bf16,
             b2 (1, fc2) f32, w3 (fc2, out) bf16, b3 (1, out) f32
    """
    w1, b1 = params["w1"], params["b1"]
    w2, b2 = params["w2"], params["b2"]
    w3, b3 = params["w3"], params["b3"]
    weights = (w1, b1, w2, b2, w3, b3)

    x = x.astype(w1.dtype)                 # bf16 activations; f32 acc in kernel

    batch, in_size = x.shape
    fc1, fc2 = w1.shape[1], w2.shape[1]
    out_size = w3.shape[1]

    tm = _pick_batch_tile(batch, max_tm)
    grid = (pl.cdiv(batch, tm),)

    def nbytes(a):
        return a.size * a.dtype.itemsize

    weight_bytes = sum(nbytes(a) for a in weights)

    # Exact per-spec VMEM footprint: buffer_count x block bytes.
    #   x tile   : double-buffered (pipeline default)
    #   out tile : double-buffered, f32
    #   weights  : single-buffered (Buffered(1))
    #   h1/h2    : f32 temporaries for one tile
    need = (2 * tm * in_size * x.dtype.itemsize          # x tiles
            + 2 * tm * out_size * 4                      # out tiles (f32)
            + 1 * weight_bytes                           # resident weights/biases
            + tm * (fc1 + fc2) * 4)                      # f32 intermediates
    cap = _vmem_capacity_bytes()
    vmem_limit = int(min(max(need + need // 4 + (2 << 20), 16 << 20),
                         (cap * 3) // 4))
    # TODO(synk): if weight_bytes alone exceeds ~40 MiB (large fc1/fc2 on v7x),
    # switch to tiling the hidden dims with an accumulator grid axis instead of
    # fully-resident weights.

    cost_estimate = pl.CostEstimate(
        flops=2 * batch * (in_size * fc1 + fc1 * fc2 + fc2 * out_size),
        transcendentals=0,
        bytes_accessed=nbytes(x) + weight_bytes + batch * out_size * 4,
    )

    try:
        call = _build_forward(x, weights, tm, grid, out_size, vmem_limit,
                              cost_estimate, single_buffer_weights=True)
        return call(x, *weights)
    except Exception:
        # Fallback for jax versions that reject Buffered(1) on constant-index
        # specs: identical kernel with default (double) buffering.
        call = _build_forward(x, weights, tm, grid, out_size, vmem_limit,
                              cost_estimate, single_buffer_weights=False)
        return call(x, *weights)


def init_params(key, input_size, fc1_hidden, fc2_hidden, output_size):
    """Deterministic synthetic init mirroring nn.Linear shapes.

    Weights stored as (in, out) = W_pt.T in bf16; biases (1, out) in f32.
    """
    ks = jax.random.split(key, 6)

    def u(k, shape, fan_in, dtype):
        bound = 1.0 / jnp.sqrt(fan_in)
        return jax.random.uniform(k, shape, jnp.float32, -bound, bound).astype(dtype)

    return {
        "w1": u(ks[0], (input_size, fc1_hidden), input_size, jnp.bfloat16),
        "b1": u(ks[1], (1, fc1_hidden), input_size, jnp.float32),
        "w2": u(ks[2], (fc1_hidden, fc2_hidden), fc1_hidden, jnp.bfloat16),
        "b2": u(ks[3], (1, fc2_hidden), fc1_hidden, jnp.float32),
        "w3": u(ks[4], (fc2_hidden, output_size), fc2_hidden, jnp.bfloat16),
        "b3": u(ks[5], (1, output_size), fc2_hidden, jnp.float32),
    }


def reference_forward(x, params):
    """Pure-JAX reference using the same bf16 inputs / f32 accumulation."""
    xb = x.astype(params["w1"].dtype)
    h1 = jnp.dot(xb, params["w1"], preferred_element_type=jnp.float32) + params["b1"]
    h1 = jnp.maximum(h1, 0.0)
    h2 = jnp.dot(h1.astype(params["w2"].dtype), params["w2"],
                 preferred_element_type=jnp.float32) + params["b2"]
    h2 = jnp.maximum(h2, 0.0)
    out = jnp.dot(h2.astype(params["w3"].dtype), params["w3"],
                  preferred_element_type=jnp.float32) + params["b3"]
    return out


if __name__ == "__main__":
    key = jax.random.PRNGKey(0)
    k_x, k_p = jax.random.split(key)

    # Small shapes consistent with the module; batch=20 is deliberately NOT a
    # multiple of the tile size to exercise OOB padding on the last tile.
    batch, input_size, fc1_hidden, fc2_hidden, output_size = 20, 32, 64, 32, 4

    x = jax.random.normal(k_x, (batch, input_size), jnp.float32)
    params = init_params(k_p, input_size, fc1_hidden, fc2_hidden, output_size)

    # Explicit small tile cap: tm=16, grid=(2,), padded last tile.
    out_tiled = jax.block_until_ready(text_model_forward(x, params, max_tm=16))

    # Default path: batch <= max_tm still splits into >=2 tiles (v7x megacore).
    out_default = jax.block_until_ready(text_model_forward(x, params))

    ref = reference_forward(x, params)
    assert out_tiled.shape == (batch, output_size)
    assert jnp.allclose(out_tiled, ref, atol=1e-2, rtol=1e-2), "mismatch (tiled)"
    assert jnp.allclose(out_default, ref, atol=1e-2, rtol=1e-2), "mismatch (default)"

    print("KERNEL_OK")
</pallas_src>

<mosaic_0001>
module attributes {stable_mosaic.version = 11 : i64} {
  func.func @_mlp_kernel(%arg0: i32, %arg1: memref<16x32xbf16, #tpu.memory_space<vmem>>, %arg2: memref<32x64xbf16, #tpu.memory_space<vmem>>, %arg3: memref<1x64xf32, #tpu.memory_space<vmem>>, %arg4: memref<64x32xbf16, #tpu.memory_space<vmem>>, %arg5: memref<1x32xf32, #tpu.memory_space<vmem>>, %arg6: memref<32x4xbf16, #tpu.memory_space<vmem>>, %arg7: memref<1x4xf32, #tpu.memory_space<vmem>>, %arg8: memref<16x4xf32, #tpu.memory_space<vmem>>) attributes {dimension_semantics = [#tpu.dimension_semantics<parallel>], iteration_bounds = array<i64: 2>, scalar_prefetch = 0 : i64, scratch_operands = 0 : i64, tpu.core_type = #tpu.core_type<tc>, window_params = [{transform_indices = @transform_0, window_bounds = array<i64: 16, 32>}, {pipeline_mode = #tpu.pipeline_mode<synchronous>, transform_indices = @transform_1, window_bounds = array<i64: 32, 64>}, {pipeline_mode = #tpu.pipeline_mode<synchronous>, transform_indices = @transform_2, window_bounds = array<i64: 1, 64>}, {pipeline_mode = #tpu.pipeline_mode<synchronous>, transform_indices = @transform_3, window_bounds = array<i64: 64, 32>}, {pipeline_mode = #tpu.pipeline_mode<synchronous>, transform_indices = @transform_4, window_bounds = array<i64: 1, 32>}, {pipeline_mode = #tpu.pipeline_mode<synchronous>, transform_indices = @transform_5, window_bounds = array<i64: 32, 4>}, {pipeline_mode = #tpu.pipeline_mode<synchronous>, transform_indices = @transform_6, window_bounds = array<i64: 1, 4>}, {transform_indices = @transform_7, window_bounds = array<i64: 16, 4>}]} {
    %c0 = arith.constant 0 : index
    %c0_0 = arith.constant 0 : index
    %0 = vector.load %arg1[%c0, %c0_0] : memref<16x32xbf16, #tpu.memory_space<vmem>>, vector<16x32xbf16>
    %c0_1 = arith.constant 0 : index
    %c0_2 = arith.constant 0 : index
    %1 = vector.load %arg2[%c0_1, %c0_2] : memref<32x64xbf16, #tpu.memory_space<vmem>>, vector<32x64xbf16>
    %cst = arith.constant dense<0.000000e+00> : vector<16x64xf32>
    %2 = tpu.matmul %0, %1, %cst {dimension_numbers = #tpu.dot_dimension_numbers<[1], [0], [0], [1], [0, 0, 1, 1], [], []>} : vector<16x32xbf16>, vector<32x64xbf16>, vector<16x64xf32> -> vector<16x64xf32>
    %c0_3 = arith.constant 0 : index
    %c0_4 = arith.constant 0 : index
    %3 = vector.load %arg3[%c0_3, %c0_4] : memref<1x64xf32, #tpu.memory_space<vmem>>, vector<1x64xf32>
    %4 = vector.broadcast %3 : vector<1x64xf32> to vector<16x64xf32>
    %5 = arith.addf %2, %4 : vector<16x64xf32>
    %cst_5 = arith.constant 0.000000e+00 : f32
    %6 = vector.broadcast %cst_5 : f32 to vector<16x64xf32>
    %7 = arith.maximumf %5, %6 : vector<16x64xf32>
    %8 = arith.truncf %7 : vector<16x64xf32> to vector<16x64xbf16>
    %c0_6 = arith.constant 0 : index
    %c0_7 = arith.constant 0 : index
    %9 = vector.load %arg4[%c0_6, %c0_7] : memref<64x32xbf16, #tpu.memory_space<vmem>>, vector<64x32xbf16>
    %cst_8 = arith.constant dense<0.000000e+00> : vector<16x32xf32>
    %10 = tpu.matmul %8, %9, %cst_8 {dimension_numbers = #tpu.dot_dimension_numbers<[1], [0], [0], [1], [0, 0, 1, 1], [], []>} : vector<16x64xbf16>, vector<64x32xbf16>, vector<16x32xf32> -> vector<16x32xf32>
    %c0_9 = arith.constant 0 : index
    %c0_10 = arith.constant 0 : index
    %11 = vector.load %arg5[%c0_9, %c0_10] : memref<1x32xf32, #tpu.memory_space<vmem>>, vector<1x32xf32>
    %12 = vector.broadcast %11 : vector<1x32xf32> to vector<16x32xf32>
    %13 = arith.addf %10, %12 : vector<16x32xf32>
    %cst_11 = arith.constant 0.000000e+00 : f32
    %14 = vector.broadcast %cst_11 : f32 to vector<16x32xf32>
    %15 = arith.maximumf %13, %14 : vector<16x32xf32>
    %16 = arith.truncf %15 : vector<16x32xf32> to vector<16x32xbf16>
    %c0_12 = arith.constant 0 : index
    %c0_13 = arith.constant 0 : index
    %17 = vector.load %arg6[%c0_12, %c0_13] : memref<32x4xbf16, #tpu.memory_space<vmem>>, vector<32x4xbf16>
    %cst_14 = arith.constant dense<0.000000e+00> : vector<16x4xf32>
    %18 = tpu.matmul %16, %17, %cst_14 {dimension_numbers = #tpu.dot_dimension_numbers<[1], [0], [0], [1], [0, 0, 1, 1], [], []>} : vector<16x32xbf16>, vector<32x4xbf16>, vector<16x4xf32> -> vector<16x4xf32>
    %c0_15 = arith.constant 0 : index
    %c0_16 = arith.constant 0 : index
    %19 = vector.load %arg7[%c0_15, %c0_16] : memref<1x4xf32, #tpu.memory_space<vmem>>, vector<1x4xf32>
    %20 = vector.broadcast %19 : vector<1x4xf32> to vector<16x4xf32>
    %21 = arith.addf %18, %20 : vector<16x4xf32>
    %c0_17 = arith.constant 0 : index
    %c0_18 = arith.constant 0 : index
    %22 = vector.load %arg8[%c0_17, %c0_18] : memref<16x4xf32, #tpu.memory_space<vmem>>, vector<16x4xf32>
    tpu.vector_store %arg8[%c0_17, %c0_18], %21 {strides = array<i32>} : memref<16x4xf32, #tpu.memory_space<vmem>>, vector<16x4xf32>,
    return
  }
  func.func @transform_0(%arg0: i32) -> (i32, i32) {
    %c0_i32 = arith.constant 0 : i32
    %c0_i32_0 = arith.constant 0 : i32
    return %arg0, %c0_i32 : i32, i32
  }
  func.func @transform_1(%arg0: i32) -> (i32, i32) {
    %c0_i32 = arith.constant 0 : i32
    %c0_i32_0 = arith.constant 0 : i32
    %c0_i32_1 = arith.constant 0 : i32
    return %c0_i32, %c0_i32_0 : i32, i32
  }
  func.func @transform_2(%arg0: i32) -> (i32, i32) {
    %c0_i32 = arith.constant 0 : i32
    %c0_i32_0 = arith.constant 0 : i32
    %c0_i32_1 = arith.constant 0 : i32
    return %c0_i32, %c0_i32_0 : i32, i32
  }
  func.func @transform_3(%arg0: i32) -> (i32, i32) {
    %c0_i32 = arith.constant 0 : i32
    %c0_i32_0 = arith.constant 0 : i32
    %c0_i32_1 = arith.constant 0 : i32
    return %c0_i32, %c0_i32_0 : i32, i32
  }
  func.func @transform_4(%arg0: i32) -> (i32, i32) {
    %c0_i32 = arith.constant 0 : i32
    %c0_i32_0 = arith.constant 0 : i32
    %c0_i32_1 = arith.constant 0 : i32
    return %c0_i32, %c0_i32_0 : i32, i32
  }
  func.func @transform_5(%arg0: i32) -> (i32, i32) {
    %c0_i32 = arith.constant 0 : i32
    %c0_i32_0 = arith.constant 0 : i32
    %c0_i32_1 = arith.constant 0 : i32
    return %c0_i32, %c0_i32_0 : i32, i32
  }
  func.func @transform_6(%arg0: i32) -> (i32, i32) {
    %c0_i32 = arith.constant 0 : i32
    %c0_i32_0 = arith.constant 0 : i32
    %c0_i32_1 = arith.constant 0 : i32
    return %c0_i32, %c0_i32_0 : i32, i32
  }
  func.func @transform_7(%arg0: i32) -> (i32, i32) {
    %c0_i32 = arith.constant 0 : i32
    %c0_i32_0 = arith.constant 0 : i32
    return %arg0, %c0_i32 : i32, i32
  }
}

module attributes {stable_mosaic.version = 11 : i64} {
  func.func @_mlp_kernel(%arg0: i32, %arg1: memref<16x32xbf16, #tpu.memory_space<vmem>>, %arg2: memref<32x64xbf16, #tpu.memory_space<vmem>>, %arg3: memref<1x64xf32, #tpu.memory_space<vmem>>, %arg4: memref<64x32xbf16, #tpu.memory_space<vmem>>, %arg5: memref<1x32xf32, #tpu.memory_space<vmem>>, %arg6: memref<32x4xbf16, #tpu.memory_space<vmem>>, %arg7: memref<1x4xf32, #tpu.memory_space<vmem>>, %arg8: memref<16x4xf32, #tpu.memory_space<vmem>>) attributes {dimension_semantics = [#tpu.dimension_semantics<parallel>], iteration_bounds = array<i64: 2>, scalar_prefetch = 0 : i64, scratch_operands = 0 : i64, tpu.core_type = #tpu.core_type<tc>, window_params = [{transform_indices = @transform_0, window_bounds = array<i64: 16, 32>}, {pipeline_mode = #tpu.pipeline_mode<synchronous>, transform_indices = @transform_1, window_bounds = array<i64: 32, 64>}, {pipeline_mode = #tpu.pipeline_mode<synchronous>, transform_indices = @transform_2, window_bounds = array<i64: 1, 64>}, {pipeline_mode = #tpu.pipeline_mode<synchronous>, transform_indices = @transform_3, window_bounds = array<i64: 64, 32>}, {pipeline_mode = #tpu.pipeline_mode<synchronous>, transform_indices = @transform_4, window_bounds = array<i64: 1, 32>}, {pipeline_mode = #tpu.pipeline_mode<synchronous>, transform_indices = @transform_5, window_bounds = array<i64: 32, 4>}, {pipeline_mode = #tpu.pipeline_mode<synchronous>, transform_indices = @transform_6, window_bounds = array<i64: 1, 4>}, {transform_indices = @transform_7, window_bounds = array<i64: 16, 4>}]} {
    %c0 = arith.constant 0 : index
    %c0_0 = arith.constant 0 : index
    %0 = vector.load %arg1[%c0, %c0_0] : memref<16x32xbf16, #tpu.memory_space<vmem>>, vector<16x32xbf16>
    %c0_1 = arith.constant 0 : index
    %c0_2 = arith.constant 0 : index
    %1 = vector.load %arg2[%c0_1, %c0_2] : memref<32x64xbf16, #tpu.memory_space<vmem>>, vector<32x64xbf16>
    %cst = arith.constant dense<0.000000e+00> : vector<16x64xf32>
    %2 = tpu.matmul %0, %1, %cst {dimension_numbers = #tpu.dot_dimension_numbers<[1], [0], [0], [1], [0, 0, 1, 1], [], []>} : vector<16x32xbf16>, vector<32x64xbf16>, vector<16x64xf32> -> vector<16x64xf32>
    %c0_3 = arith.constant 0 : index
    %c0_4 = arith.constant 0 : index
    %3 = vector.load %arg3[%c0_3, %c0_4] : memref<1x64xf32, #tpu.memory_space<vmem>>, vector<1x64xf32>
    %4 = vector.broadcast %3 : vector<1x64xf32> to vector<16x64xf32>
    %5 = arith.addf %2, %4 : vector<16x64xf32>
    %cst_5 = arith.constant 0.000000e+00 : f32
    %6 = vector.broadcast %cst_5 : f32 to vector<16x64xf32>
    %7 = arith.maximumf %5, %6 : vector<16x64xf32>
    %8 = arith.truncf %7 : vector<16x64xf32> to vector<16x64xbf16>
    %c0_6 = arith.constant 0 : index
    %c0_7 = arith.constant 0 : index
    %9 = vector.load %arg4[%c0_6, %c0_7] : memref<64x32xbf16, #tpu.memory_space<vmem>>, vector<64x32xbf16>
    %cst_8 = arith.constant dense<0.000000e+00> : vector<16x32xf32>
    %10 = tpu.matmul %8, %9, %cst_8 {dimension_numbers = #tpu.dot_dimension_numbers<[1], [0], [0], [1], [0, 0, 1, 1], [], []>} : vector<16x64xbf16>, vector<64x32xbf16>, vector<16x32xf32> -> vector<16x32xf32>
    %c0_9 = arith.constant 0 : index
    %c0_10 = arith.constant 0 : index
    %11 = vector.load %arg5[%c0_9, %c0_10] : memref<1x32xf32, #tpu.memory_space<vmem>>, vector<1x32xf32>
    %12 = vector.broadcast %11 : vector<1x32xf32> to vector<16x32xf32>
    %13 = arith.addf %10, %12 : vector<16x32xf32>
    %cst_11 = arith.constant 0.000000e+00 : f32
    %14 = vector.broadcast %cst_11 : f32 to vector<16x32xf32>
    %15 = arith.maximumf %13, %14 : vector<16x32xf32>
    %16 = arith.truncf %15 : vector<16x32xf32> to vector<16x32xbf16>
    %c0_12 = arith.constant 0 : index
    %c0_13 = arith.constant 0 : index
    %17 = vector.load %arg6[%c0_12, %c0_13] : memref<32x4xbf16, #tpu.memory_space<vmem>>, vector<32x4xbf16>
    %cst_14 = arith.constant dense<0.000000e+00> : vector<16x4xf32>
    %18 = tpu.matmul %16, %17, %cst_14 {dimension_numbers = #tpu.dot_dimension_numbers<[1], [0], [0], [1], [0, 0, 1, 1], [], []>} : vector<16x32xbf16>, vector<32x4xbf16>, vector<16x4xf32> -> vector<16x4xf32>
    %c0_15 = arith.constant 0 : index
    %c0_16 = arith.constant 0 : index
    %19 = vector.load %arg7[%c0_15, %c0_16] : memref<1x4xf32, #tpu.memory_space<vmem>>, vector<1x4xf32>
    %20 = vector.broadcast %19 : vector<1x4xf32> to vector<16x4xf32>
    %21 = arith.addf %18, %20 : vector<16x4xf32>
    %c0_17 = arith.constant 0 : index
    %c0_18 = arith.constant 0 : index
    %22 = vector.load %arg8[%c0_17, %c0_18] : memref<16x4xf32, #tpu.memory_space<vmem>>, vector<16x4xf32>
    tpu.vector_store %arg8[%c0_17, %c0_18], %21 {strides = array<i32>} : memref<16x4xf32, #tpu.memory_space<vmem>>, vector<16x4xf32>,
    return
  }
  func.func @transform_0(%arg0: i32) -> (i32, i32) {
    %c0_i32 = arith.constant 0 : i32
    %c0_i32_0 = arith.constant 0 : i32
    return %arg0, %c0_i32 : i32, i32
  }
  func.func @transform_1(%arg0: i32) -> (i32, i32) {
    %c0_i32 = arith.constant 0 : i32
    %c0_i32_0 = arith.constant 0 : i32
    %c0_i32_1 = arith.constant 0 : i32
    return %c0_i32, %c0_i32_0 : i32, i32
  }
  func.func @transform_2(%arg0: i32) -> (i32, i32) {
    %c0_i32 = arith.constant 0 : i32
    %c0_i32_0 = arith.constant 0 : i32
    %c0_i32_1 = arith.constant 0 : i32
    return %c0_i32, %c0_i32_0 : i32, i32
  }
  func.func @transform_3(%arg0: i32) -> (i32, i32) {
    %c0_i32 = arith.constant 0 : i32
    %c0_i32_0 = arith.constant 0 : i32
    %c0_i32_1 = arith.constant 0 : i32
    return %c0_i32, %c0_i32_0 : i32, i32
  }
  func.func @transform_4(%arg0: i32) -> (i32, i32) {
    %c0_i32 = arith.constant 0 : i32
    %c0_i32_0 = arith.constant 0 : i32
    %c0_i32_1 = arith.constant 0 : i32
    return %c0_i32, %c0_i32_0 : i32, i32
  }
  func.func @transform_5(%arg0: i32) -> (i32, i32) {
    %c0_i32 = arith.constant 0 : i32
    %c0_i32_0 = arith.constant 0 : i32
    %c0_i32_1 = arith.constant 0 : i32
    return %c0_i32, %c0_i32_0 : i32, i32
  }
  func.func @transform_6(%arg0: i32) -> (i32, i32) {
    %c0_i32 = arith.constant 0 : i32
    %c0_i32_0 = arith.constant 0 : i32
    %c0_i32_1 = arith.constant 0 : i32
    return %c0_i32, %c0_i32_0 : i32, i32
  }
  func.func @transform_7(%arg0: i32) -> (i32, i32) {
    %c0_i32 = arith.constant 0 : i32
    %c0_i32_0 = arith.constant 0 : i32
    return %arg0, %c0_i32 : i32, i32
  }
}

</mosaic_0001>

<llo_original>
// kernel: tpu_custom_call.1
$region0: #{tpu_custom_call.1}
  #allocation0 [shape = 'u32[]', space=smem, size = 0x4, offset = 0x4, fixed_abs, tag = 'smem constant byte address 0x4 - core index']
  #allocation1 [shape = 'u32[144,128]{1,0:T(1,128)}', space=vmem, size = 0x12000, scoped, tag = 'internal scratch']
  %s0 = inlined_call_operand.vmem [shape: bf16[20,32], index: 0, kind: input, shape index: {}]
  %s1 = inlined_call_operand.vmem [shape: bf16[32,64], index: 1, kind: input, shape index: {}]
  %s2 = inlined_call_operand.vmem [shape: f32[1,64], index: 2, kind: input, shape index: {}]
  %s3 = inlined_call_operand.vmem [shape: bf16[64,32], index: 3, kind: input, shape index: {}]
  %s4 = inlined_call_operand.vmem [shape: f32[1,32], index: 4, kind: input, shape index: {}]
  %s5 = inlined_call_operand.vmem [shape: bf16[32,4], index: 5, kind: input, shape index: {}]
  %s6 = inlined_call_operand.vmem [shape: f32[1,4], index: 6, kind: input, shape index: {}]
  %s7 = inlined_call_operand.vmem [shape: f32[20,4], index: 7, kind: output, shape index: {}]
  %s8 = sld [smem:[#allocation0]]
  $region109: #{tpu_custom_call.1} parent=0
    _
  %s10 = ssub.s32 1, %s8
  %s11 = scalar_select 0, %s10, %s8
  $region1: #{tpu_custom_call.1} parent=0
    #allocation2 [shape = 'u8[16384]{0}', space=vmem, size = 0x4000, scoped, tag = 'output window, operand 0']
    loop: start=0, step=1, limit=4
    $region2: #{tpu_custom_call.1} parent=1 // loop_pre_header
      _
    $region3: #{tpu_custom_call.1} parent=1 // loop_header
      %s13 = sphi 0, %s17
      %p14 = scmp.ge.s32.totalorder %s13, 4
      %s23 = sphi 0, %s25
      %s26 = sphi 0, %s23
      %s27 = sphi 0, %s26
      %s43 = sphi 0, %s27
      %s47 = sphi 0, %s47
      %s49 = sphi 0, %s47
      %s50 = sphi 0, %s49
      %s64 = sphi 0, %s50
      %s68 = sphi 0, %s68
      %s70 = sphi 0, %s68
      %s71 = sphi 0, %s70
      %s85 = sphi 0, %s71
      %s89 = sphi 0, %s89
      %s91 = sphi 0, %s89
      %s92 = sphi 0, %s91
      %s106 = sphi 0, %s92
      %s110 = sphi 0, %s110
      %s112 = sphi 0, %s110
      %s113 = sphi 0, %s112
      %s127 = sphi 0, %s113
      %s131 = sphi 0, %s131
      %s133 = sphi 0, %s131
      %s134 = sphi 0, %s133
      %s148 = sphi 0, %s134
      %s152 = sphi 0, %s152
      %s154 = sphi 0, %s152
      %s155 = sphi 0, %s154
      %s169 = sphi 0, %s155
      %s175 = sphi 0, %s177
      %s178 = sphi 0, %s175
      %s179 = sphi 0, %s178
      %s195 = sphi 0, %s179
    $region4: #{tpu_custom_call.1} parent=1 // loop_header_branch
      %16 = sbr.rel (%p14) target = $region8
    $region5: #{tpu_custom_call.1} parent=1 // loop_body
      %s18 = ssub.s32 %s13, 1
      %s19 = ssub.s32 %s13, 2
      %s20 = sadd.s32 %s13, 1
      %s21 = ssub.s32 %s13, %s20
      %p22 = scmp.eq.s32.totalorder %s21, 0
      %s24 = sadd.s32 %s23, 1
      %s25 = scalar_select %p22, %s23, %s24
      %p28 = pneg %p22
      %p29 = scmp.eq.s32.totalorder %s13, 1
      %p30 = por %p28, %p29
      %p31 = scmp.ne.s32.totalorder %s23, %s26
      %p32 = scmp.eq.s32.totalorder %s13, 0
      %p33 = por %p31, %p32
      %p34 = scmp.ne.s32.totalorder %s23, %s26
      %p35 = scmp.eq.s32.totalorder %s18, 1
      %p36 = por %p34, %p35
      %p37 = scmp.ne.s32.totalorder %s26, %s27
      %p38 = scmp.eq.s32.totalorder %s18, 0
      %p39 = por %p37, %p38
      %p40 = scmp.ne.s32.totalorder %s26, %s27
      %p41 = scmp.eq.s32.totalorder %s19, 1
      %p42 = por %p40, %p41
      %p44 = scmp.ne.s32.totalorder %s27, %s43
      %p45 = scmp.eq.s32.totalorder %s19, 0
      %p46 = por %p44, %p45
      %s48 = sadd.s32 %s47, 1
      %p51 = scmp.eq.s32.totalorder %s13, 1
      %p52 = scmp.ne.s32.totalorder %s47, %s49
      %p53 = scmp.eq.s32.totalorder %s13, 0
      %p54 = por %p52, %p53
      %p55 = scmp.ne.s32.totalorder %s47, %s49
      %p56 = scmp.eq.s32.totalorder %s18, 1
      %p57 = por %p55, %p56
      %p58 = scmp.ne.s32.totalorder %s49, %s50
      %p59 = scmp.eq.s32.totalorder %s18, 0
      %p60 = por %p58, %p59
      %p61 = scmp.ne.s32.totalorder %s49, %s50
      %p62 = scmp.eq.s32.totalorder %s19, 1
      %p63 = por %p61, %p62
      %p65 = scmp.ne.s32.totalorder %s50, %s64
      %p66 = scmp.eq.s32.totalorder %s19, 0
      %p67 = por %p65, %p66
      %s69 = sadd.s32 %s68, 1
      %p72 = scmp.eq.s32.totalorder %s13, 1
      %p73 = scmp.ne.s32.totalorder %s68, %s70
      %p74 = scmp.eq.s32.totalorder %s13, 0
      %p75 = por %p73, %p74
      %p76 = scmp.ne.s32.totalorder %s68, %s70
      %p77 = scmp.eq.s32.totalorder %s18, 1
      %p78 = por %p76, %p77
      %p79 = scmp.ne.s32.totalorder %s70, %s71
      %p80 = scmp.eq.s32.totalorder %s18, 0
      %p81 = por %p79, %p80
      %p82 = scmp.ne.s32.totalorder %s70, %s71
      %p83 = scmp.eq.s32.totalorder %s19, 1
      %p84 = por %p82, %p83
      %p86 = scmp.ne.s32.totalorder %s71, %s85
      %p87 = scmp.eq.s32.totalorder %s19, 0
      %p88 = por %p86, %p87
      %s90 = sadd.s32 %s89, 1
      %p93 = scmp.eq.s32.totalorder %s13, 1
      %p94 = scmp.ne.s32.totalorder %s89, %s91
      %p95 = scmp.eq.s32.totalorder %s13, 0
      %p96 = por %p94, %p95
      %p97 = scmp.ne.s32.totalorder %s89, %s91
      %p98 = scmp.eq.s32.totalorder %s18, 1
      %p99 = por %p97, %p98
      %p100 = scmp.ne.s32.totalorder %s91, %s92
      %p101 = scmp.eq.s32.totalorder %s18, 0
      %p102 = por %p100, %p101
      %p103 = scmp.ne.s32.totalorder %s91, %s92
      %p104 = scmp.eq.s32.totalorder %s19, 1
      %p105 = por %p103, %p104
      %p107 = scmp.ne.s32.totalorder %s92, %s106
      %p108 = scmp.eq.s32.totalorder %s19, 0
      %p109 = por %p107, %p108
      %s111 = sadd.s32 %s110, 1
      %p114 = scmp.eq.s32.totalorder %s13, 1
      %p115 = scmp.ne.s32.totalorder %s110, %s112
      %p116 = scmp.eq.s32.totalorder %s13, 0
      %p117 = por %p115, %p116
      %p118 = scmp.ne.s32.totalorder %s110, %s112
      %p119 = scmp.eq.s32.totalorder %s18, 1
      %p120 = por %p118, %p119
      %p121 = scmp.ne.s32.totalorder %s112, %s113
      %p122 = scmp.eq.s32.totalorder %s18, 0
      %p123 = por %p121, %p122
      %p124 = scmp.ne.s32.totalorder %s112, %s113
      %p125 = scmp.eq.s32.totalorder %s19, 1
      %p126 = por %p124, %p125
      %p128 = scmp.ne.s32.totalorder %s113, %s127
      %p129 = scmp.eq.s32.totalorder %s19, 0
      %p130 = por %p128, %p129
      %s132 = sadd.s32 %s131, 1
      %p135 = scmp.eq.s32.totalorder %s13, 1
      %p136 = scmp.ne.s32.totalorder %s131, %s133
      %p137 = scmp.eq.s32.totalorder %s13, 0
      %p138 = por %p136, %p137
      %p139 = scmp.ne.s32.totalorder %s131, %s133
      %p140 = scmp.eq.s32.totalorder %s18, 1
      %p141 = por %p139, %p140
      %p142 = scmp.ne.s32.totalorder %s133, %s134
      %p143 = scmp.eq.s32.totalorder %s18, 0
      %p144 = por %p142, %p143
      %p145 = scmp.ne.s32.totalorder %s133, %s134
      %p146 = scmp.eq.s32.totalorder %s19, 1
      %p147 = por %p145, %p146
      %p149 = scmp.ne.s32.totalorder %s134, %s148
      %p150 = scmp.eq.s32.totalorder %s19, 0
      %p151 = por %p149, %p150
      %s153 = sadd.s32 %s152, 1
      %p156 = scmp.eq.s32.totalorder %s13, 1
      %p157 = scmp.ne.s32.totalorder %s152, %s154
      %p158 = scmp.eq.s32.totalorder %s13, 0
      %p159 = por %p157, %p158
      %p160 = scmp.ne.s32.totalorder %s152, %s154
      %p161 = scmp.eq.s32.totalorder %s18, 1
      %p162 = por %p160, %p161
      %p163 = scmp.ne.s32.totalorder %s154, %s155
      %p164 = scmp.eq.s32.totalorder %s18, 0
      %p165 = por %p163, %p164
      %p166 = scmp.ne.s32.totalorder %s154, %s155
      %p167 = scmp.eq.s32.totalorder %s19, 1
      %p168 = por %p166, %p167
      %p170 = scmp.ne.s32.totalorder %s155, %s169
      %p171 = scmp.eq.s32.totalorder %s19, 0
      %p172 = por %p170, %p171
      %s173 = ssub.s32 %s13, %s20
      %p174 = scmp.eq.s32.totalorder %s173, 0
      %s176 = sadd.s32 %s175, 1
      %s177 = scalar_select %p174, %s175, %s176
      %p180 = pneg %p174
      %p181 = scmp.eq.s32.totalorder %s13, 1
      %p182 = por %p180, %p181
      %p183 = scmp.ne.s32.totalorder %s175, %s178
      %p184 = scmp.eq.s32.totalorder %s13, 0
      %p185 = por %p183, %p184
      %p186 = scmp.ne.s32.totalorder %s175, %s178
      %p187 = scmp.eq.s32.totalorder %s18, 1
      %p188 = por %p186, %p187
      %p189 = scmp.ne.s32.totalorder %s178, %s179
      %p190 = scmp.eq.s32.totalorder %s18, 0
      %p191 = por %p189, %p190
      %p192 = scmp.ne.s32.totalorder %s178, %s179
      %p193 = scmp.eq.s32.totalorder %s19, 1
      %p194 = por %p192, %p193
      %p196 = scmp.ne.s32.totalorder %s179, %s195
      %p197 = scmp.eq.s32.totalorder %s19, 0
      %p198 = por %p196, %p197
      %p199 = scmp.le.s32.totalorder 1, %s13
      %p200 = scmp.lt.s32.totalorder %s13, 3
      %p201 = pnand %p199, %p200
      %p202 = pneg %p201
      // Predicated region
      $region9: #{tpu_custom_call.1} parent=5 // pred_check
        _
      $region10: #{tpu_custom_call.1} parent=5 // pred_check_branch
        %204 = sbr.rel (%p201) target = $region12
      $region11: #{tpu_custom_call.1} parent=5 // pred_region
        %s205 = ssub.s32 %s13, 1
        // Predicated region
        $region13: #{tpu_custom_call.1} parent=11 // pred_check
          %p206 = pneg %p60
        $region14: #{tpu_custom_call.1} parent=11 // pred_check_branch
          %208 = sbr.rel (%p206) target = $region16
        $region15: #{tpu_custom_call.1} parent=11 // pred_region
          _
        $region16: #{tpu_custom_call.1} parent=11 // pred_fallthru
          _
        // Predicated region
        $region17: #{tpu_custom_call.1} parent=11 // pred_check
          %p209 = pneg %p81
        $region18: #{tpu_custom_call.1} parent=11 // pred_check_branch
          %211 = sbr.rel (%p209) target = $region20
        $region19: #{tpu_custom_call.1} parent=11 // pred_region
          _
        $region20: #{tpu_custom_call.1} parent=11 // pred_fallthru
          _
        // Predicated region
        $region21: #{tpu_custom_call.1} parent=11 // pred_check
          %p212 = pneg %p102
        $region22: #{tpu_custom_call.1} parent=11 // pred_check_branch
          %214 = sbr.rel (%p212) target = $region24
        $region23: #{tpu_custom_call.1} parent=11 // pred_region
          _
        $region24: #{tpu_custom_call.1} parent=11 // pred_fallthru
          _
        // Predicated region
        $region25: #{tpu_custom_call.1} parent=11 // pred_check
          %p215 = pneg %p123
        $region26: #{tpu_custom_call.1} parent=11 // pred_check_branch
          %217 = sbr.rel (%p215) target = $region28
        $region27: #{tpu_custom_call.1} parent=11 // pred_region
          _
        $region28: #{tpu_custom_call.1} parent=11 // pred_fallthru
          _
        // Predicated region
        $region29: #{tpu_custom_call.1} parent=11 // pred_check
          %p218 = pneg %p144
        $region30: #{tpu_custom_call.1} parent=11 // pred_check_branch
          %220 = sbr.rel (%p218) target = $region32
        $region31: #{tpu_custom_call.1} parent=11 // pred_region
          _
        $region32: #{tpu_custom_call.1} parent=11 // pred_fallthru
          _
        // Predicated region
        $region33: #{tpu_custom_call.1} parent=11 // pred_check
          %p221 = pneg %p165
        $region34: #{tpu_custom_call.1} parent=11 // pred_check_branch
          %223 = sbr.rel (%p221) target = $region36
        $region35: #{tpu_custom_call.1} parent=11 // pred_region
          _
        $region36: #{tpu_custom_call.1} parent=11 // pred_fallthru
          _
      $region12: #{tpu_custom_call.1} parent=5 // pred_fallthru
        _
      %p224 = scmp.lt.s32.totalorder %s13, 2
      // Predicated region
      $region37: #{tpu_custom_call.1} parent=5 // pred_check
        %p225 = pneg %p224
      $region38: #{tpu_custom_call.1} parent=5 // pred_check_branch
        %227 = sbr.rel (%p225) target = $region40
      $region39: #{tpu_custom_call.1} parent=5 // pred_region
        // Predicated region
        $region41: #{tpu_custom_call.1} parent=39 // pred_check
          %p228 = pneg %p33
        $region42: #{tpu_custom_call.1} parent=39 // pred_check_branch
          %230 = sbr.rel (%p228) target = $region44
        $region43: #{tpu_custom_call.1} parent=39 // pred_region
          %s231 = smul.u32 2, %s13
          %s232 = ssub.s32 3, %s231
          %p233 = scmp.lt.s32.totalorder %s232, 2
          %s234 = scalar_select %p233, %s232, 2
          %s235 = smul.u32 64, %s234
          %p236 = scmp.lt.s32.totalorder %s231, 2
          %s237 = scalar_select %p236, %s231, 2
          %s238 = smul.addr %s237, 4
          %s239 = scalar_lea.vmem %s0, %s238
          %s240 = smul.u32 2, %s13
          %s241 = ssub.s32 3, %s240
          %p242 = scmp.lt.s32.totalorder %s241, 2
          %s243 = scalar_select %p242, %s241, 2
          %s244 = smul.u32 64, %s243
        $region44: #{tpu_custom_call.1} parent=39 // pred_fallthru
          _
      $region40: #{tpu_custom_call.1} parent=5 // pred_fallthru
        _
      %p245 = scmp.le.s32.totalorder 1, %s13
      %p246 = scmp.lt.s32.totalorder %s13, 3
      %p247 = pnand %p245, %p246
      %p248 = pneg %p247
      // Predicated region
      $region45: #{tpu_custom_call.1} parent=5 // pred_check
        _
      $region46: #{tpu_custom_call.1} parent=5 // pred_check_branch
        %250 = sbr.rel (%p247) target = $region48
      $region47: #{tpu_custom_call.1} parent=5 // pred_region
        %s251 = ssub.s32 %s13, 1
        %s252 = smul.u32 2, %s18
        %s253 = ssub.s32 3, %s252
        %p254 = scmp.lt.s32.totalorder %s253, 2
        %s255 = scalar_select %p254, %s253, 2
        %s256 = smul.u32 64, %s255
        %p257 = scmp.lt.s32.totalorder %s252, 2
        %s258 = scalar_select %p257, %s252, 2
        %s259 = smul.addr %s258, 4
        %s260 = scalar_lea.vmem %s0, %s259
        %p261 = pneg %p39
        %p262 = pneg %p36
        %p263 = pneg %p60
        %p264 = pneg %p57
        %p265 = pneg %p81
        %p266 = pneg %p78
        %p267 = pneg %p102
        %p268 = pneg %p99
        %p269 = pneg %p123
        %p270 = pneg %p120
        %p271 = pneg %p144
        %p272 = pneg %p141
        %p273 = pneg %p165
        %p274 = pneg %p162
        %p275 = pneg %p191
        %p276 = pneg %p188
        %s277 = sand.u32 %s178, 1
        %s278 = sand.u32 %s178, 1
        %s279 = smul.addr %s278, 16
        %s280 = scalar_lea.vmem [#allocation2], %s279
        %s281 = smul.u32 2, %s18
        %s282 = ssub.s32 3, %s281
        %p283 = scmp.lt.s32.totalorder %s282, 2
        %s284 = scalar_select %p283, %s282, 2
        %s285 = smul.u32 64, %s284
        %p286 = scmp.lt.s32.totalorder %s281, 2
        %s287 = scalar_select %p286, %s281, 2
        %s288 = smul.addr %s287, 4
        %s289 = scalar_lea.vmem %s0, %s288
        %s290 = smul.u32 2, %s18
        %s291 = ssub.s32 3, %s290
        %p292 = scmp.lt.s32.totalorder %s291, 2
        %s293 = scalar_select %p292, %s291, 2
        %s294 = smul.u32 64, %s293
        %s295 = smul.u32 2, %s18
        %s296 = ssub.s32 3, %s295
        %p297 = scmp.lt.s32.totalorder %s296, 2
        %s298 = scalar_select %p297, %s296, 2
        %s299 = smul.u32 128, %s298
        %v301 = vld [vmem:[%s289] sm:$0xf]
        %v302 = vld [vmem:[%s289 + $0x4] sm:$0xf]
        %v303 = vld [vmem:[%s1] sm:$0xf]
        %v304 = vld [vmem:[%s1 + $0x4] sm:$0xf]
        %v305 = vld [vmem:[%s1 + $0x8] sm:$0xf]
        %v306 = vld [vmem:[%s1 + $0xc] sm:$0xf]
        %v307 = vld [vmem:[%s2] sm:$0x1]
        %v309 = vlaneseq
        %v310 = vshrl.u32 %v309, 7
        %v311 = vsub.s32 0, %v310
        %v312 = vrot.slane %v307, %v311
        %v316 = vunpack.c.l.b16 %v301
        %v317 = vunpack.c.l.b16 %v302
        %v318 = vpack.c.b16 %v317, %v316
        %v323 = vunpack.c.l.b16 %v303
        %v324 = vunpack.c.l.b16 %v304
        %v325 = vunpack.c.l.b16 %v305
        %v326 = vunpack.c.l.b16 %v306
        %v327 = vpack.c.b16 %v324, %v323
        %v328 = vpack.c.b16 %v326, %v325
        %vm331 = vcmask 261120
        %v333 = vsel %vm331, %v318, 0
        %335 = vmatprep.subr.bf16.mxu0 0
        %336 = vmatpush1.bf16.msra.mxu0 %v327
        %337 = vmatprep.subr.bf16.mxu0 0
        %338 = vmatpush1.bf16.msra.mxu0 %v328
        %339 = vmatprep.subr.bf16.mxu0 0
        %340 = vmatpush1.bf16.msra.mxu0 0
        %341 = vmatprep.subr.bf16.mxu0 0
        %342 = vmatpush1.bf16.msra.mxu0 0
        %343 = vmatprep.subr.bf16.mxu0 0
        %344 = vmatpush1.bf16.msra.mxu0 0
        %345 = vmatprep.subr.bf16.mxu0 0
        %346 = vmatpush1.bf16.msra.mxu0 0
        %347 = vmatprep.subr.bf16.mxu0 0
        %348 = vmatpush1.bf16.msra.mxu0 0
        %349 = vmatprep.subr.bf16.mxu0 0
        %350 = vmatpush1.bf16.msra.mxu0 0
        %351 = vmatprep.subr.bf16.mxu0 0
        %352 = vmatpush1.bf16.msra.mxu0 0
        %353 = vmatprep.subr.bf16.mxu0 0
        %354 = vmatpush1.bf16.msra.mxu0 0
        %355 = vmatprep.subr.bf16.mxu0 0
        %356 = vmatpush1.bf16.msra.mxu0 0
        %357 = vmatprep.subr.bf16.mxu0 0
        %358 = vmatpush1.bf16.msra.mxu0 0
        %359 = vmatprep.subr.bf16.mxu0 0
        %360 = vmatpush1.bf16.msra.mxu0 0
        %361 = vmatprep.subr.bf16.mxu0 0
        %362 = vmatpush1.bf16.msra.mxu0 0
        %363 = vmatprep.subr.bf16.mxu0 0
        %364 = vmatpush1.bf16.msra.mxu0 0
        %365 = vmatprep.subr.bf16.mxu0 0
        %366 = vmatpush1.bf16.msra.mxu0 0
        %367 = vmatprep.mubr.bf16.mxu0 0
        %368 = vmatmul.mubr.bf16.gmra.mrb[0].mxu0 %v333
        %v369 = vpop.f32.mrb[0].mxu0
        %v370 = vadd.f32 %v312, %v369
        %v371 = vpop.f32.mrb[0].mxu0
        %v372 = vpop.f32.mrb[0].mxu0
        %v373 = vadd.f32 %v312, %v372
        %v374 = vpop.f32.mrb[0].mxu0
        %375 = vdwg.mxu0
        %v376 = vmax.f32 %v370, 0.0
        %v377 = vmax.f32 %v373, 0.0
        %v378 = vpack.c.bf16 %v377, %v376
        %v379 = vld [vmem:[%s3] sm:$0xf]
        %v380 = vld [vmem:[%s3 + $0x4] sm:$0xf]
        %v381 = vld [vmem:[%s3 + $0x8] sm:$0xf]
        %v382 = vld [vmem:[%s3 + $0xc] sm:$0xf]
        %v383 = vld [vmem:[%s3 + $0x10] sm:$0xf]
        %v384 = vld [vmem:[%s3 + $0x14] sm:$0xf]
        %v385 = vld [vmem:[%s3 + $0x18] sm:$0xf]
        %v386 = vld [vmem:[%s3 + $0x1c] sm:$0xf]
        %v387 = vld [vmem:[%s4] sm:$0x1]
        %v389 = vlaneseq
        %v390 = vshrl.u32 %v389, 7
        %v391 = vsub.s32 0, %v390
        %v392 = vrot.slane %v387, %v391
        %v402 = vunpack.c.l.b16 %v379
        %v403 = vunpack.c.l.b16 %v380
        %v404 = vunpack.c.l.b16 %v381
        %v405 = vunpack.c.l.b16 %v382
        %v406 = vunpack.c.l.b16 %v383
        %v407 = vunpack.c.l.b16 %v384
        %v408 = vunpack.c.l.b16 %v385
        %v409 = vunpack.c.l.b16 %v386
        %v410 = vpack.c.b16 %v403, %v402
        %v411 = vpack.c.b16 %v405, %v404
        %v412 = vpack.c.b16 %v407, %v406
        %v413 = vpack.c.b16 %v409, %v408
        %vm418 = vcmask 523264
        %v420 = vsel %vm418, %v378, 0
        %422 = vmatprep.subr.bf16.mxu0 0
        %423 = vmatpush1.bf16.msra.mxu0 %v410
        %424 = vmatprep.subr.bf16.mxu0 0
        %425 = vmatpush1.bf16.msra.mxu0 %v411
        %426 = vmatprep.subr.bf16.mxu0 0
        %427 = vmatpush1.bf16.msra.mxu0 %v412
        %428 = vmatprep.subr.bf16.mxu0 0
        %429 = vmatpush1.bf16.msra.mxu0 %v413
        %430 = vmatprep.subr.bf16.mxu0 0
        %431 = vmatpush1.bf16.msra.mxu0 0
        %432 = vmatprep.subr.bf16.mxu0 0
        %433 = vmatpush1.bf16.msra.mxu0 0
        %434 = vmatprep.subr.bf16.mxu0 0
        %435 = vmatpush1.bf16.msra.mxu0 0
        %436 = vmatprep.subr.bf16.mxu0 0
        %437 = vmatpush1.bf16.msra.mxu0 0
        %438 = vmatprep.subr.bf16.mxu0 0
        %439 = vmatpush1.bf16.msra.mxu0 0
        %440 = vmatprep.subr.bf16.mxu0 0
        %441 = vmatpush1.bf16.msra.mxu0 0
        %442 = vmatprep.subr.bf16.mxu0 0
        %443 = vmatpush1.bf16.msra.mxu0 0
        %444 = vmatprep.subr.bf16.mxu0 0
        %445 = vmatpush1.bf16.msra.mxu0 0
        %446 = vmatprep.subr.bf16.mxu0 0
        %447 = vmatpush1.bf16.msra.mxu0 0
        %448 = vmatprep.subr.bf16.mxu0 0
        %449 = vmatpush1.bf16.msra.mxu0 0
        %450 = vmatprep.subr.bf16.mxu0 0
        %451 = vmatpush1.bf16.msra.mxu0 0
        %452 = vmatprep.subr.bf16.mxu0 0
        %453 = vmatpush1.bf16.msra.mxu0 0
        %454 = vmatprep.mubr.bf16.mxu0 0
        %455 = vmatmul.mubr.bf16.gmra.mrb[0].mxu0 %v420
        %v456 = vpop.f32.mrb[0].mxu0
        %v457 = vadd.f32 %v392, %v456
        %v458 = vpop.f32.mrb[0].mxu0
        %v459 = vpop.f32.mrb[0].mxu0
        %v460 = vadd.f32 %v392, %v459
        %v461 = vpop.f32.mrb[0].mxu0
        %462 = vdwg.mxu0
        %v463 = vmax.f32 %v457, 0.0
        %v464 = vmax.f32 %v460, 0.0
        %v465 = vpack.c.bf16 %v464, %v463
        %v466 = vld [vmem:[%s5] sm:$0xf]
        %v467 = vld [vmem:[%s5 + $0x4] sm:$0xf]
        %v468 = vld [vmem:[%s5 + $0x8] sm:$0xf]
        %v469 = vld [vmem:[%s5 + $0xc] sm:$0xf]
        %v470 = vld [vmem:[%s6] sm:$0x1]
        %v472 = vlaneseq
        %v473 = vshrl.u32 %v472, 7
        %v474 = vsub.s32 0, %v473
        %v475 = vrot.slane %v470, %v474
        %v481 = vunpack.c.l.b16 %v466
        %v482 = vunpack.c.l.b16 %v467
        %v483 = vunpack.c.l.b16 %v468
        %v484 = vunpack.c.l.b16 %v469
        %v485 = vpack.c.b16 %v482, %v481
        %v486 = vpack.c.b16 %v484, %v483
        %v490 = vsel %vm331, %v465, 0
        %492 = vmatprep.subr.bf16.mxu0 0
        %493 = vmatpush1.bf16.msra.mxu0 %v485
        %494 = vmatprep.subr.bf16.mxu0 0
        %495 = vmatpush1.bf16.msra.mxu0 %v486
        %496 = vmatprep.subr.bf16.mxu0 0
        %497 = vmatpush1.bf16.msra.mxu0 0
        %498 = vmatprep.subr.bf16.mxu0 0
        %499 = vmatpush1.bf16.msra.mxu0 0
        %500 = vmatprep.subr.bf16.mxu0 0
        %501 = vmatpush1.bf16.msra.mxu0 0
        %502 = vmatprep.subr.bf16.mxu0 0
        %503 = vmatpush1.bf16.msra.mxu0 0
        %504 = vmatprep.subr.bf16.mxu0 0
        %505 = vmatpush1.bf16.msra.mxu0 0
        %506 = vmatprep.subr.bf16.mxu0 0
        %507 = vmatpush1.bf16.msra.mxu0 0
        %508 = vmatprep.subr.bf16.mxu0 0
        %509 = vmatpush1.bf16.msra.mxu0 0
        %510 = vmatprep.subr.bf16.mxu0 0
        %511 = vmatpush1.bf16.msra.mxu0 0
        %512 = vmatprep.subr.bf16.mxu0 0
        %513 = vmatpush1.bf16.msra.mxu0 0
        %514 = vmatprep.subr.bf16.mxu0 0
        %515 = vmatpush1.bf16.msra.mxu0 0
        %516 = vmatprep.subr.bf16.mxu0 0
        %517 = vmatpush1.bf16.msra.mxu0 0
        %518 = vmatprep.subr.bf16.mxu0 0
        %519 = vmatpush1.bf16.msra.mxu0 0
        %520 = vmatprep.subr.bf16.mxu0 0
        %521 = vmatpush1.bf16.msra.mxu0 0
        %522 = vmatprep.subr.bf16.mxu0 0
        %523 = vmatpush1.bf16.msra.mxu0 0
        %524 = vmatprep.mubr.bf16.mxu0 0
        %525 = vmatmul.mubr.bf16.gmra.mrb[0].mxu0 %v490
        %v526 = vpop.f32.mrb[0].mxu0
        %v527 = vadd.f32 %v475, %v526
        %v528 = vpop.f32.mrb[0].mxu0
        %v529 = vpop.f32.mrb[0].mxu0
        %v530 = vadd.f32 %v475, %v529
        %v531 = vpop.f32.mrb[0].mxu0
        %532 = vdwg.mxu0
        %vm533 = vcmask 31744
        %534 = vst.msk [vmem:[%s280] sm:$0xff] %vm533, %v527
        %535 = vst.msk [vmem:[%s280 + $0x8] sm:$0xff] %vm533, %v530
        %s536 = sand.u32 %s178, 1
        %s537 = sand.u32 %s178, 1
        %s538 = smul.addr %s537, 16
        %s539 = scalar_lea.vmem [#allocation2], %s538
        // Predicated region
        $region49: #{tpu_custom_call.1} parent=47 // pred_check
          %p540 = pneg %p188
        $region50: #{tpu_custom_call.1} parent=47 // pred_check_branch
          %542 = sbr.rel (%p540) target = $region52
        $region51: #{tpu_custom_call.1} parent=47 // pred_region
          %s543 = smul.u32 2, %s18
          %s544 = ssub.s32 3, %s543
          %p545 = scmp.lt.s32.totalorder %s544, 2
          %s546 = scalar_select %p545, %s544, 2
          %s547 = smul.u32 128, %s546
          %p548 = scmp.ne.s32.totalorder 0, %s547
          %s549 = smul.addr %s543, 8
          %s550 = scalar_lea.vmem %s7, %s549
          // Predicated region
          $region53: #{tpu_custom_call.1} parent=51 // pred_check
            %p551 = pneg %p548
          $region54: #{tpu_custom_call.1} parent=51 // pred_check_branch
            %553 = sbr.rel (%p551) target = $region56
          $region55: #{tpu_custom_call.1} parent=51 // pred_region
            // Predicated region
            $region57: #{tpu_custom_call.1} parent=55 // pred_check
              _
            $region58: #{tpu_custom_call.1} parent=55 // pred_check_branch
              %555 = sbr.rel (0) target = $region60
            $region59: #{tpu_custom_call.1} parent=55 // pred_region
              // Predicated region
              $region79: #{tpu_custom_call.1} parent=59 // pred_check
                _
              $region80: #{tpu_custom_call.1} parent=59 // pred_check_branch
                %606 = sbr.rel (0) target = $region82
              $region81: #{tpu_custom_call.1} parent=59 // pred_region
                %s607 = sshrl.u32 %s546, 1
                // While loop
                $region83: #{tpu_custom_call.1} parent=81 // loop_pre_header
                  _
                $region84: #{tpu_custom_call.1} parent=81 // loop_header
                  %s609 = sphi 0, %s611
                  %p610 = scmp.ge.s32.totalorder %s609, %s607
                  %s614 = sphi 0, %s623
                  %s615 = sphi %s539, %s626
                  %s616 = sphi %s550, %s627
                $region85: #{tpu_custom_call.1} parent=81 // loop_header_branch
                  %613 = sbr.rel (%p610) target = $region89
                $region86: #{tpu_custom_call.1} parent=81 // loop_body
                  %v617 = vld [vmem:[%s615] sm:$0xff]
                  %618 = vst [vmem:[%s616] sm:$0xff] %v617
                  %v619 = vld [vmem:[%s615 + $0x8] sm:$0xff]
                  %620 = vst [vmem:[%s616 + $0x8] sm:$0xff] %v619
                  %s621 = sadd.s32 1, %s614
                  %p622 = scmp.ge.s32.totalorder %s621, %s607
                  %s623 = scalar_select %p622, 0, %s621
                  %s624 = smul.u32 %s623, 16
                  %s625 = smul.u32 %s623, 16
                  %s626 = scalar_lea.vmem %s539, %s624 [#allocation2]
                  %s627 = scalar_lea.vmem %s550, %s625
                $region87: #{tpu_custom_call.1} parent=81 // loop_footer
                  %s611 = sadd.s32 %s609, 1
                $region88: #{tpu_custom_call.1} parent=81 // loop_footer_branch
                  %608 = sbr.rel target = $region84
                $region89: #{tpu_custom_call.1} parent=81 // loop_exit
                  _
                %s628 = sshrl.u32 %s546, 1
                %s629 = sand.u32 %s546, 1
                %s630 = smul.u32 %s628, 2
                %s631 = smul.u32 8, %s630
                %s632 = scalar_lea.vmem %s539, %s631 [#allocation2]
                %s633 = smul.u32 8, %s630
                %s634 = scalar_lea.vmem %s550, %s633
                // While loop
                $region90: #{tpu_custom_call.1} parent=81 // loop_pre_header
                  _
                $region91: #{tpu_custom_call.1} parent=81 // loop_header
                  %s636 = sphi 0, %s638
                  %p637 = scmp.ge.s32.totalorder %s636, %s629
                  %s641 = sphi 0, %s648
                  %s642 = sphi %s632, %s651
                  %s643 = sphi %s634, %s652
                $region92: #{tpu_custom_call.1} parent=81 // loop_header_branch
                  %640 = sbr.rel (%p637) target = $region96
                $region93: #{tpu_custom_call.1} parent=81 // loop_body
                  %v644 = vld [vmem:[%s642] sm:$0xff]
                  %645 = vst [vmem:[%s643] sm:$0xff] %v644
                  %s646 = sadd.s32 1, %s641
                  %p647 = scmp.ge.s32.totalorder %s646, %s629
                  %s648 = scalar_select %p647, 0, %s646
                  %s649 = smul.u32 %s648, 8
                  %s650 = smul.u32 %s648, 8
                  %s651 = scalar_lea.vmem %s632, %s649 [#allocation2]
                  %s652 = scalar_lea.vmem %s634, %s650
                $region94: #{tpu_custom_call.1} parent=81 // loop_footer
                  %s638 = sadd.s32 %s636, 1
                $region95: #{tpu_custom_call.1} parent=81 // loop_footer_branch
                  %635 = sbr.rel target = $region91
                $region96: #{tpu_custom_call.1} parent=81 // loop_exit
                  _
              $region82: #{tpu_custom_call.1} parent=59 // pred_fallthru
                _
              // Predicated region
              $region97: #{tpu_custom_call.1} parent=59 // pred_check
                _
              $region98: #{tpu_custom_call.1} parent=59 // pred_check_branch
                %654 = sbr.rel target = $region100
              $region99: #{tpu_custom_call.1} parent=59 // pred_region
                _
              $region100: #{tpu_custom_call.1} parent=59 // pred_fallthru
                _
            $region60: #{tpu_custom_call.1} parent=55 // pred_fallthru
              _
            // Predicated region
            $region61: #{tpu_custom_call.1} parent=55 // pred_check
              _
            $region62: #{tpu_custom_call.1} parent=55 // pred_check_branch
              %557 = sbr.rel target = $region64
            $region63: #{tpu_custom_call.1} parent=55 // pred_region
              %s559 = sshrl.u32 %s546, 1
              // While loop
              $region65: #{tpu_custom_call.1} parent=63 // loop_pre_header
                _
              $region66: #{tpu_custom_call.1} parent=63 // loop_header
                %s561 = sphi 0, %s563
                %p562 = scmp.ge.s32.totalorder %s561, %s559
                %s566 = sphi 0, %s575
                %s567 = sphi %s539, %s578
                %s568 = sphi %s550, %s579
              $region67: #{tpu_custom_call.1} parent=63 // loop_header_branch
                %565 = sbr.rel (%p562) target = $region71
              $region68: #{tpu_custom_call.1} parent=63 // loop_body
                %v569 = vld [vmem:[%s567] sm:$0xff]
                %570 = vst [vmem:[%s568] sm:$0xff] %v569
                %v571 = vld [vmem:[%s567 + $0x8] sm:$0xff]
                %572 = vst [vmem:[%s568 + $0x8] sm:$0xff] %v571
                %s573 = sadd.s32 1, %s566
                %p574 = scmp.ge.s32.totalorder %s573, %s559
                %s575 = scalar_select %p574, 0, %s573
                %s576 = smul.u32 %s575, 16
                %s577 = smul.u32 %s575, 16
                %s578 = scalar_lea.vmem %s539, %s576 [#allocation2]
                %s579 = scalar_lea.vmem %s550, %s577
              $region69: #{tpu_custom_call.1} parent=63 // loop_footer
                %s563 = sadd.s32 %s561, 1
              $region70: #{tpu_custom_call.1} parent=63 // loop_footer_branch
                %560 = sbr.rel target = $region66
              $region71: #{tpu_custom_call.1} parent=63 // loop_exit
                _
              %s580 = sshrl.u32 %s546, 1
              %s581 = sand.u32 %s546, 1
              %s582 = smul.u32 %s580, 2
              %s583 = smul.u32 8, %s582
              %s584 = scalar_lea.vmem %s539, %s583 [#allocation2]
              %s585 = smul.u32 8, %s582
              %s586 = scalar_lea.vmem %s550, %s585
              // While loop
              $region72: #{tpu_custom_call.1} parent=63 // loop_pre_header
                _
              $region73: #{tpu_custom_call.1} parent=63 // loop_header
                %s588 = sphi 0, %s590
                %p589 = scmp.ge.s32.totalorder %s588, %s581
                %s593 = sphi 0, %s600
                %s594 = sphi %s584, %s603
                %s595 = sphi %s586, %s604
              $region74: #{tpu_custom_call.1} parent=63 // loop_header_branch
                %592 = sbr.rel (%p589) target = $region78
              $region75: #{tpu_custom_call.1} parent=63 // loop_body
                %v596 = vld [vmem:[%s594] sm:$0xff]
                %597 = vst [vmem:[%s595] sm:$0xff] %v596
                %s598 = sadd.s32 1, %s593
                %p599 = scmp.ge.s32.totalorder %s598, %s581
                %s600 = scalar_select %p599, 0, %s598
                %s601 = smul.u32 %s600, 8
                %s602 = smul.u32 %s600, 8
                %s603 = scalar_lea.vmem %s584, %s601 [#allocation2]
                %s604 = scalar_lea.vmem %s586, %s602
              $region76: #{tpu_custom_call.1} parent=63 // loop_footer
                %s590 = sadd.s32 %s588, 1
              $region77: #{tpu_custom_call.1} parent=63 // loop_footer_branch
                %587 = sbr.rel target = $region73
              $region78: #{tpu_custom_call.1} parent=63 // loop_exit
                _
            $region64: #{tpu_custom_call.1} parent=55 // pred_fallthru
              _
          $region56: #{tpu_custom_call.1} parent=51 // pred_fallthru
            _
          %655 = vnop
        $region52: #{tpu_custom_call.1} parent=47 // pred_fallthru
          _
      $region48: #{tpu_custom_call.1} parent=5 // pred_fallthru
        _
      %p656 = scmp.le.s32.totalorder 2, %s13
      // Predicated region
      $region101: #{tpu_custom_call.1} parent=5 // pred_check
        %p657 = pneg %p656
      $region102: #{tpu_custom_call.1} parent=5 // pred_check_branch
        %659 = sbr.rel (%p657) target = $region104
      $region103: #{tpu_custom_call.1} parent=5 // pred_region
        %s660 = ssub.s32 %s13, 2
        // Predicated region
        $region105: #{tpu_custom_call.1} parent=103 // pred_check
          %p661 = pneg %p194
        $region106: #{tpu_custom_call.1} parent=103 // pred_check_branch
          %663 = sbr.rel (%p661) target = $region108
        $region107: #{tpu_custom_call.1} parent=103 // pred_region
          %s664 = sand.u32 %s179, 1
          %s665 = sand.u32 %s179, 1
          %s666 = smul.addr %s665, 16
          %s667 = scalar_lea.vmem [#allocation2], %s666
        $region108: #{tpu_custom_call.1} parent=103 // pred_fallthru
          _
      $region104: #{tpu_custom_call.1} parent=5 // pred_fallthru
        _
    $region6: #{tpu_custom_call.1} parent=1 // loop_footer
      %s17 = sadd.s32 1, %s13
    $region7: #{tpu_custom_call.1} parent=1 // loop_footer_branch
      %12 = sbr.rel target = $region3
    $region8: #{tpu_custom_call.1} parent=1 // loop_exit
      _

// kernel: tpu_custom_call.1
$region0: #{tpu_custom_call.1}
  #allocation0 [shape = 'u32[]', space=smem, size = 0x4, offset = 0x4, fixed_abs, tag = 'smem constant byte address 0x4 - core index']
  #allocation1 [shape = 'u32[144,128]{1,0:T(1,128)}', space=vmem, size = 0x12000, scoped, tag = 'internal scratch']
  %s0 = inlined_call_operand.vmem [shape: bf16[20,32], index: 0, kind: input, shape index: {}]
  %s1 = inlined_call_operand.vmem [shape: bf16[32,64], index: 1, kind: input, shape index: {}]
  %s2 = inlined_call_operand.vmem [shape: f32[1,64], index: 2, kind: input, shape index: {}]
  %s3 = inlined_call_operand.vmem [shape: bf16[64,32], index: 3, kind: input, shape index: {}]
  %s4 = inlined_call_operand.vmem [shape: f32[1,32], index: 4, kind: input, shape index: {}]
  %s5 = inlined_call_operand.vmem [shape: bf16[32,4], index: 5, kind: input, shape index: {}]
  %s6 = inlined_call_operand.vmem [shape: f32[1,4], index: 6, kind: input, shape index: {}]
  %s7 = inlined_call_operand.vmem [shape: f32[20,4], index: 7, kind: output, shape index: {}]
  %s8 = sld [smem:[#allocation0]]
  $region109: #{tpu_custom_call.1} parent=0
    _
  %s10 = ssub.s32 1, %s8
  %s11 = scalar_select 0, %s10, %s8
  $region1: #{tpu_custom_call.1} parent=0
    #allocation2 [shape = 'u8[16384]{0}', space=vmem, size = 0x4000, scoped, tag = 'output window, operand 0']
    loop: start=0, step=1, limit=4
    $region2: #{tpu_custom_call.1} parent=1 // loop_pre_header
      _
    $region3: #{tpu_custom_call.1} parent=1 // loop_header
      %s13 = sphi 0, %s17
      %p14 = scmp.ge.s32.totalorder %s13, 4
      %s23 = sphi 0, %s25
      %s26 = sphi 0, %s23
      %s27 = sphi 0, %s26
      %s43 = sphi 0, %s27
      %s47 = sphi 0, %s47
      %s49 = sphi 0, %s47
      %s50 = sphi 0, %s49
      %s64 = sphi 0, %s50
      %s68 = sphi 0, %s68
      %s70 = sphi 0, %s68
      %s71 = sphi 0, %s70
      %s85 = sphi 0, %s71
      %s89 = sphi 0, %s89
      %s91 = sphi 0, %s89
      %s92 = sphi 0, %s91
      %s106 = sphi 0, %s92
      %s110 = sphi 0, %s110
      %s112 = sphi 0, %s110
      %s113 = sphi 0, %s112
      %s127 = sphi 0, %s113
      %s131 = sphi 0, %s131
      %s133 = sphi 0, %s131
      %s134 = sphi 0, %s133
      %s148 = sphi 0, %s134
      %s152 = sphi 0, %s152
      %s154 = sphi 0, %s152
      %s155 = sphi 0, %s154
      %s169 = sphi 0, %s155
      %s175 = sphi 0, %s177
      %s178 = sphi 0, %s175
      %s179 = sphi 0, %s178
      %s195 = sphi 0, %s179
    $region4: #{tpu_custom_call.1} parent=1 // loop_header_branch
      %16 = sbr.rel (%p14) target = $region8
    $region5: #{tpu_custom_call.1} parent=1 // loop_body
      %s18 = ssub.s32 %s13, 1
      %s19 = ssub.s32 %s13, 2
      %s20 = sadd.s32 %s13, 1
      %s21 = ssub.s32 %s13, %s20
      %p22 = scmp.eq.s32.totalorder %s21, 0
      %s24 = sadd.s32 %s23, 1
      %s25 = scalar_select %p22, %s23, %s24
      %p28 = pneg %p22
      %p29 = scmp.eq.s32.totalorder %s13, 1
      %p30 = por %p28, %p29
      %p31 = scmp.ne.s32.totalorder %s23, %s26
      %p32 = scmp.eq.s32.totalorder %s13, 0
      %p33 = por %p31, %p32
      %p34 = scmp.ne.s32.totalorder %s23, %s26
      %p35 = scmp.eq.s32.totalorder %s18, 1
      %p36 = por %p34, %p35
      %p37 = scmp.ne.s32.totalorder %s26, %s27
      %p38 = scmp.eq.s32.totalorder %s18, 0
      %p39 = por %p37, %p38
      %p40 = scmp.ne.s32.totalorder %s26, %s27
      %p41 = scmp.eq.s32.totalorder %s19, 1
      %p42 = por %p40, %p41
      %p44 = scmp.ne.s32.totalorder %s27, %s43
      %p45 = scmp.eq.s32.totalorder %s19, 0
      %p46 = por %p44, %p45
      %s48 = sadd.s32 %s47, 1
      %p51 = scmp.eq.s32.totalorder %s13, 1
      %p52 = scmp.ne.s32.totalorder %s47, %s49
      %p53 = scmp.eq.s32.totalorder %s13, 0
      %p54 = por %p52, %p53
      %p55 = scmp.ne.s32.totalorder %s47, %s49
      %p56 = scmp.eq.s32.totalorder %s18, 1
      %p57 = por %p55, %p56
      %p58 = scmp.ne.s32.totalorder %s49, %s50
      %p59 = scmp.eq.s32.totalorder %s18, 0
      %p60 = por %p58, %p59
      %p61 = scmp.ne.s32.totalorder %s49, %s50
      %p62 = scmp.eq.s32.totalorder %s19, 1
      %p63 = por %p61, %p62
      %p65 = scmp.ne.s32.totalorder %s50, %s64
      %p66 = scmp.eq.s32.totalorder %s19, 0
      %p67 = por %p65, %p66
      %s69 = sadd.s32 %s68, 1
      %p72 = scmp.eq.s32.totalorder %s13, 1
      %p73 = scmp.ne.s32.totalorder %s68, %s70
      %p74 = scmp.eq.s32.totalorder %s13, 0
      %p75 = por %p73, %p74
      %p76 = scmp.ne.s32.totalorder %s68, %s70
      %p77 = scmp.eq.s32.totalorder %s18, 1
      %p78 = por %p76, %p77
      %p79 = scmp.ne.s32.totalorder %s70, %s71
      %p80 = scmp.eq.s32.totalorder %s18, 0
      %p81 = por %p79, %p80
      %p82 = scmp.ne.s32.totalorder %s70, %s71
      %p83 = scmp.eq.s32.totalorder %s19, 1
      %p84 = por %p82, %p83
      %p86 = scmp.ne.s32.totalorder %s71, %s85
      %p87 = scmp.eq.s32.totalorder %s19, 0
      %p88 = por %p86, %p87
      %s90 = sadd.s32 %s89, 1
      %p93 = scmp.eq.s32.totalorder %s13, 1
      %p94 = scmp.ne.s32.totalorder %s89, %s91
      %p95 = scmp.eq.s32.totalorder %s13, 0
      %p96 = por %p94, %p95
      %p97 = scmp.ne.s32.totalorder %s89, %s91
      %p98 = scmp.eq.s32.totalorder %s18, 1
      %p99 = por %p97, %p98
      %p100 = scmp.ne.s32.totalorder %s91, %s92
      %p101 = scmp.eq.s32.totalorder %s18, 0
      %p102 = por %p100, %p101
      %p103 = scmp.ne.s32.totalorder %s91, %s92
      %p104 = scmp.eq.s32.totalorder %s19, 1
      %p105 = por %p103, %p104
      %p107 = scmp.ne.s32.totalorder %s92, %s106
      %p108 = scmp.eq.s32.totalorder %s19, 0
      %p109 = por %p107, %p108
      %s111 = sadd.s32 %s110, 1
      %p114 = scmp.eq.s32.totalorder %s13, 1
      %p115 = scmp.ne.s32.totalorder %s110, %s112
      %p116 = scmp.eq.s32.totalorder %s13, 0
      %p117 = por %p115, %p116
      %p118 = scmp.ne.s32.totalorder %s110, %s112
      %p119 = scmp.eq.s32.totalorder %s18, 1
      %p120 = por %p118, %p119
      %p121 = scmp.ne.s32.totalorder %s112, %s113
      %p122 = scmp.eq.s32.totalorder %s18, 0
      %p123 = por %p121, %p122
      %p124 = scmp.ne.s32.totalorder %s112, %s113
      %p125 = scmp.eq.s32.totalorder %s19, 1
      %p126 = por %p124, %p125
      %p128 = scmp.ne.s32.totalorder %s113, %s127
      %p129 = scmp.eq.s32.totalorder %s19, 0
      %p130 = por %p128, %p129
      %s132 = sadd.s32 %s131, 1
      %p135 = scmp.eq.s32.totalorder %s13, 1
      %p136 = scmp.ne.s32.totalorder %s131, %s133
      %p137 = scmp.eq.s32.totalorder %s13, 0
      %p138 = por %p136, %p137
      %p139 = scmp.ne.s32.totalorder %s131, %s133
      %p140 = scmp.eq.s32.totalorder %s18, 1
      %p141 = por %p139, %p140
      %p142 = scmp.ne.s32.totalorder %s133, %s134
      %p143 = scmp.eq.s32.totalorder %s18, 0
      %p144 = por %p142, %p143
      %p145 = scmp.ne.s32.totalorder %s133, %s134
      %p146 = scmp.eq.s32.totalorder %s19, 1
      %p147 = por %p145, %p146
      %p149 = scmp.ne.s32.totalorder %s134, %s148
      %p150 = scmp.eq.s32.totalorder %s19, 0
      %p151 = por %p149, %p150
      %s153 = sadd.s32 %s152, 1
      %p156 = scmp.eq.s32.totalorder %s13, 1
      %p157 = scmp.ne.s32.totalorder %s152, %s154
      %p158 = scmp.eq.s32.totalorder %s13, 0
      %p159 = por %p157, %p158
      %p160 = scmp.ne.s32.totalorder %s152, %s154
      %p161 = scmp.eq.s32.totalorder %s18, 1
      %p162 = por %p160, %p161
      %p163 = scmp.ne.s32.totalorder %s154, %s155
      %p164 = scmp.eq.s32.totalorder %s18, 0
      %p165 = por %p163, %p164
      %p166 = scmp.ne.s32.totalorder %s154, %s155
      %p167 = scmp.eq.s32.totalorder %s19, 1
      %p168 = por %p166, %p167
      %p170 = scmp.ne.s32.totalorder %s155, %s169
      %p171 = scmp.eq.s32.totalorder %s19, 0
      %p172 = por %p170, %p171
      %s173 = ssub.s32 %s13, %s20
      %p174 = scmp.eq.s32.totalorder %s173, 0
      %s176 = sadd.s32 %s175, 1
      %s177 = scalar_select %p174, %s175, %s176
      %p180 = pneg %p174
      %p181 = scmp.eq.s32.totalorder %s13, 1
      %p182 = por %p180, %p181
      %p183 = scmp.ne.s32.totalorder %s175, %s178
      %p184 = scmp.eq.s32.totalorder %s13, 0
      %p185 = por %p183, %p184
      %p186 = scmp.ne.s32.totalorder %s175, %s178
      %p187 = scmp.eq.s32.totalorder %s18, 1
      %p188 = por %p186, %p187
      %p189 = scmp.ne.s32.totalorder %s178, %s179
      %p190 = scmp.eq.s32.totalorder %s18, 0
      %p191 = por %p189, %p190
      %p192 = scmp.ne.s32.totalorder %s178, %s179
      %p193 = scmp.eq.s32.totalorder %s19, 1
      %p194 = por %p192, %p193
      %p196 = scmp.ne.s32.totalorder %s179, %s195
      %p197 = scmp.eq.s32.totalorder %s19, 0
      %p198 = por %p196, %p197
      %p199 = scmp.le.s32.totalorder 1, %s13
      %p200 = scmp.lt.s32.totalorder %s13, 3
      %p201 = pnand %p199, %p200
      %p202 = pneg %p201
      // Predicated region
      $region9: #{tpu_custom_call.1} parent=5 // pred_check
        _
      $region10: #{tpu_custom_call.1} parent=5 // pred_check_branch
        %204 = sbr.rel (%p201) target = $region12
      $region11: #{tpu_custom_call.1} parent=5 // pred_region
        %s205 = ssub.s32 %s13, 1
        // Predicated region
        $region13: #{tpu_custom_call.1} parent=11 // pred_check
          %p206 = pneg %p60
        $region14: #{tpu_custom_call.1} parent=11 // pred_check_branch
          %208 = sbr.rel (%p206) target = $region16
        $region15: #{tpu_custom_call.1} parent=11 // pred_region
          _
        $region16: #{tpu_custom_call.1} parent=11 // pred_fallthru
          _
        // Predicated region
        $region17: #{tpu_custom_call.1} parent=11 // pred_check
          %p209 = pneg %p81
        $region18: #{tpu_custom_call.1} parent=11 // pred_check_branch
          %211 = sbr.rel (%p209) target = $region20
        $region19: #{tpu_custom_call.1} parent=11 // pred_region
          _
        $region20: #{tpu_custom_call.1} parent=11 // pred_fallthru
          _
        // Predicated region
        $region21: #{tpu_custom_call.1} parent=11 // pred_check
          %p212 = pneg %p102
        $region22: #{tpu_custom_call.1} parent=11 // pred_check_branch
          %214 = sbr.rel (%p212) target = $region24
        $region23: #{tpu_custom_call.1} parent=11 // pred_region
          _
        $region24: #{tpu_custom_call.1} parent=11 // pred_fallthru
          _
        // Predicated region
        $region25: #{tpu_custom_call.1} parent=11 // pred_check
          %p215 = pneg %p123
        $region26: #{tpu_custom_call.1} parent=11 // pred_check_branch
          %217 = sbr.rel (%p215) target = $region28
        $region27: #{tpu_custom_call.1} parent=11 // pred_region
          _
        $region28: #{tpu_custom_call.1} parent=11 // pred_fallthru
          _
        // Predicated region
        $region29: #{tpu_custom_call.1} parent=11 // pred_check
          %p218 = pneg %p144
        $region30: #{tpu_custom_call.1} parent=11 // pred_check_branch
          %220 = sbr.rel (%p218) target = $region32
        $region31: #{tpu_custom_call.1} parent=11 // pred_region
          _
        $region32: #{tpu_custom_call.1} parent=11 // pred_fallthru
          _
        // Predicated region
        $region33: #{tpu_custom_call.1} parent=11 // pred_check
          %p221 = pneg %p165
        $region34: #{tpu_custom_call.1} parent=11 // pred_check_branch
          %223 = sbr.rel (%p221) target = $region36
        $region35: #{tpu_custom_call.1} parent=11 // pred_region
          _
        $region36: #{tpu_custom_call.1} parent=11 // pred_fallthru
          _
      $region12: #{tpu_custom_call.1} parent=5 // pred_fallthru
        _
      %p224 = scmp.lt.s32.totalorder %s13, 2
      // Predicated region
      $region37: #{tpu_custom_call.1} parent=5 // pred_check
        %p225 = pneg %p224
      $region38: #{tpu_custom_call.1} parent=5 // pred_check_branch
        %227 = sbr.rel (%p225) target = $region40
      $region39: #{tpu_custom_call.1} parent=5 // pred_region
        // Predicated region
        $region41: #{tpu_custom_call.1} parent=39 // pred_check
          %p228 = pneg %p33
        $region42: #{tpu_custom_call.1} parent=39 // pred_check_branch
          %230 = sbr.rel (%p228) target = $region44
        $region43: #{tpu_custom_call.1} parent=39 // pred_region
          %s231 = smul.u32 2, %s13
          %s232 = ssub.s32 3, %s231
          %p233 = scmp.lt.s32.totalorder %s232, 2
          %s234 = scalar_select %p233, %s232, 2
          %s235 = smul.u32 64, %s234
          %p236 = scmp.lt.s32.totalorder %s231, 2
          %s237 = scalar_select %p236, %s231, 2
          %s238 = smul.addr %s237, 4
          %s239 = scalar_lea.vmem %s0, %s238
          %s240 = smul.u32 2, %s13
          %s241 = ssub.s32 3, %s240
          %p242 = scmp.lt.s32.totalorder %s241, 2
          %s243 = scalar_select %p242, %s241, 2
          %s244 = smul.u32 64, %s243
        $region44: #{tpu_custom_call.1} parent=39 // pred_fallthru
          _
      $region40: #{tpu_custom_call.1} parent=5 // pred_fallthru
        _
      %p245 = scmp.le.s32.totalorder 1, %s13
      %p246 = scmp.lt.s32.totalorder %s13, 3
      %p247 = pnand %p245, %p246
      %p248 = pneg %p247
      // Predicated region
      $region45: #{tpu_custom_call.1} parent=5 // pred_check
        _
      $region46: #{tpu_custom_call.1} parent=5 // pred_check_branch
        %250 = sbr.rel (%p247) target = $region48
      $region47: #{tpu_custom_call.1} parent=5 // pred_region
        %s251 = ssub.s32 %s13, 1
        %s252 = smul.u32 2, %s18
        %s253 = ssub.s32 3, %s252
        %p254 = scmp.lt.s32.totalorder %s253, 2
        %s255 = scalar_select %p254, %s253, 2
        %s256 = smul.u32 64, %s255
        %p257 = scmp.lt.s32.totalorder %s252, 2
        %s258 = scalar_select %p257, %s252, 2
        %s259 = smul.addr %s258, 4
        %s260 = scalar_lea.vmem %s0, %s259
        %p261 = pneg %p39
        %p262 = pneg %p36
        %p263 = pneg %p60
        %p264 = pneg %p57
        %p265 = pneg %p81
        %p266 = pneg %p78
        %p267 = pneg %p102
        %p268 = pneg %p99
        %p269 = pneg %p123
        %p270 = pneg %p120
        %p271 = pneg %p144
        %p272 = pneg %p141
        %p273 = pneg %p165
        %p274 = pneg %p162
        %p275 = pneg %p191
        %p276 = pneg %p188
        %s277 = sand.u32 %s178, 1
        %s278 = sand.u32 %s178, 1
        %s279 = smul.addr %s278, 16
        %s280 = scalar_lea.vmem [#allocation2], %s279
        %s281 = smul.u32 2, %s18
        %s282 = ssub.s32 3, %s281
        %p283 = scmp.lt.s32.totalorder %s282, 2
        %s284 = scalar_select %p283, %s282, 2
        %s285 = smul.u32 64, %s284
        %p286 = scmp.lt.s32.totalorder %s281, 2
        %s287 = scalar_select %p286, %s281, 2
        %s288 = smul.addr %s287, 4
        %s289 = scalar_lea.vmem %s0, %s288
        %s290 = smul.u32 2, %s18
        %s291 = ssub.s32 3, %s290
        %p292 = scmp.lt.s32.totalorder %s291, 2
        %s293 = scalar_select %p292, %s291, 2
        %s294 = smul.u32 64, %s293
        %s295 = smul.u32 2, %s18
        %s296 = ssub.s32 3, %s295
        %p297 = scmp.lt.s32.totalorder %s296, 2
        %s298 = scalar_select %p297, %s296, 2
        %s299 = smul.u32 128, %s298
        %v301 = vld [vmem:[%s289] sm:$0xf]
        %v302 = vld [vmem:[%s289 + $0x4] sm:$0xf]
        %v303 = vld [vmem:[%s1] sm:$0xf]
        %v304 = vld [vmem:[%s1 + $0x4] sm:$0xf]
        %v305 = vld [vmem:[%s1 + $0x8] sm:$0xf]
        %v306 = vld [vmem:[%s1 + $0xc] sm:$0xf]
        %v307 = vld [vmem:[%s2] sm:$0x1]
        %v309 = vlaneseq
        %v310 = vshrl.u32 %v309, 7
        %v311 = vsub.s32 0, %v310
        %v312 = vrot.slane %v307, %v311
        %v316 = vunpack.c.l.b16 %v301
        %v317 = vunpack.c.l.b16 %v302
        %v318 = vpack.c.b16 %v317, %v316
        %v323 = vunpack.c.l.b16 %v303
        %v324 = vunpack.c.l.b16 %v304
        %v325 = vunpack.c.l.b16 %v305
        %v326 = vunpack.c.l.b16 %v306
        %v327 = vpack.c.b16 %v324, %v323
        %v328 = vpack.c.b16 %v326, %v325
        %vm331 = vcmask 261120
        %v333 = vsel %vm331, %v318, 0
        %335 = vmatprep.subr.bf16.mxu0 0
        %336 = vmatpush1.bf16.msra.mxu0 %v327
        %337 = vmatprep.subr.bf16.mxu0 0
        %338 = vmatpush1.bf16.msra.mxu0 %v328
        %339 = vmatprep.subr.bf16.mxu0 0
        %340 = vmatpush1.bf16.msra.mxu0 0
        %341 = vmatprep.subr.bf16.mxu0 0
        %342 = vmatpush1.bf16.msra.mxu0 0
        %343 = vmatprep.subr.bf16.mxu0 0
        %344 = vmatpush1.bf16.msra.mxu0 0
        %345 = vmatprep.subr.bf16.mxu0 0
        %346 = vmatpush1.bf16.msra.mxu0 0
        %347 = vmatprep.subr.bf16.mxu0 0
        %348 = vmatpush1.bf16.msra.mxu0 0
        %349 = vmatprep.subr.bf16.mxu0 0
        %350 = vmatpush1.bf16.msra.mxu0 0
        %351 = vmatprep.subr.bf16.mxu0 0
        %352 = vmatpush1.bf16.msra.mxu0 0
        %353 = vmatprep.subr.bf16.mxu0 0
        %354 = vmatpush1.bf16.msra.mxu0 0
        %355 = vmatprep.subr.bf16.mxu0 0
        %356 = vmatpush1.bf16.msra.mxu0 0
        %357 = vmatprep.subr.bf16.mxu0 0
        %358 = vmatpush1.bf16.msra.mxu0 0
        %359 = vmatprep.subr.bf16.mxu0 0
        %360 = vmatpush1.bf16.msra.mxu0 0
        %361 = vmatprep.subr.bf16.mxu0 0
        %362 = vmatpush1.bf16.msra.mxu0 0
        %363 = vmatprep.subr.bf16.mxu0 0
        %364 = vmatpush1.bf16.msra.mxu0 0
        %365 = vmatprep.subr.bf16.mxu0 0
        %366 = vmatpush1.bf16.msra.mxu0 0
        %367 = vmatprep.mubr.bf16.mxu0 0
        %368 = vmatmul.mubr.bf16.gmra.mrb[0].mxu0 %v333
        %v369 = vpop.f32.mrb[0].mxu0
        %v370 = vadd.f32 %v312, %v369
        %v371 = vpop.f32.mrb[0].mxu0
        %v372 = vpop.f32.mrb[0].mxu0
        %v373 = vadd.f32 %v312, %v372
        %v374 = vpop.f32.mrb[0].mxu0
        %375 = vdwg.mxu0
        %v376 = vmax.f32 %v370, 0.0
        %v377 = vmax.f32 %v373, 0.0
        %v378 = vpack.c.bf16 %v377, %v376
        %v379 = vld [vmem:[%s3] sm:$0xf]
        %v380 = vld [vmem:[%s3 + $0x4] sm:$0xf]
        %v381 = vld [vmem:[%s3 + $0x8] sm:$0xf]
        %v382 = vld [vmem:[%s3 + $0xc] sm:$0xf]
        %v383 = vld [vmem:[%s3 + $0x10] sm:$0xf]
        %v384 = vld [vmem:[%s3 + $0x14] sm:$0xf]
        %v385 = vld [vmem:[%s3 + $0x18] sm:$0xf]
        %v386 = vld [vmem:[%s3 + $0x1c] sm:$0xf]
        %v387 = vld [vmem:[%s4] sm:$0x1]
        %v389 = vlaneseq
        %v390 = vshrl.u32 %v389, 7
        %v391 = vsub.s32 0, %v390
        %v392 = vrot.slane %v387, %v391
        %v402 = vunpack.c.l.b16 %v379
        %v403 = vunpack.c.l.b16 %v380
        %v404 = vunpack.c.l.b16 %v381
        %v405 = vunpack.c.l.b16 %v382
        %v406 = vunpack.c.l.b16 %v383
        %v407 = vunpack.c.l.b16 %v384
        %v408 = vunpack.c.l.b16 %v385
        %v409 = vunpack.c.l.b16 %v386
        %v410 = vpack.c.b16 %v403, %v402
        %v411 = vpack.c.b16 %v405, %v404
        %v412 = vpack.c.b16 %v407, %v406
        %v413 = vpack.c.b16 %v409, %v408
        %vm418 = vcmask 523264
        %v420 = vsel %vm418, %v378, 0
        %422 = vmatprep.subr.bf16.mxu0 0
        %423 = vmatpush1.bf16.msra.mxu0 %v410
        %424 = vmatprep.subr.bf16.mxu0 0
        %425 = vmatpush1.bf16.msra.mxu0 %v411
        %426 = vmatprep.subr.bf16.mxu0 0
        %427 = vmatpush1.bf16.msra.mxu0 %v412
        %428 = vmatprep.subr.bf16.mxu0 0
        %429 = vmatpush1.bf16.msra.mxu0 %v413
        %430 = vmatprep.subr.bf16.mxu0 0
        %431 = vmatpush1.bf16.msra.mxu0 0
        %432 = vmatprep.subr.bf16.mxu0 0
        %433 = vmatpush1.bf16.msra.mxu0 0
        %434 = vmatprep.subr.bf16.mxu0 0
        %435 = vmatpush1.bf16.msra.mxu0 0
        %436 = vmatprep.subr.bf16.mxu0 0
        %437 = vmatpush1.bf16.msra.mxu0 0
        %438 = vmatprep.subr.bf16.mxu0 0
        %439 = vmatpush1.bf16.msra.mxu0 0
        %440 = vmatprep.subr.bf16.mxu0 0
        %441 = vmatpush1.bf16.msra.mxu0 0
        %442 = vmatprep.subr.bf16.mxu0 0
        %443 = vmatpush1.bf16.msra.mxu0 0
        %444 = vmatprep.subr.bf16.mxu0 0
        %445 = vmatpush1.bf16.msra.mxu0 0
        %446 = vmatprep.subr.bf16.mxu0 0
        %447 = vmatpush1.bf16.msra.mxu0 0
        %448 = vmatprep.subr.bf16.mxu0 0
        %449 = vmatpush1.bf16.msra.mxu0 0
        %450 = vmatprep.subr.bf16.mxu0 0
        %451 = vmatpush1.bf16.msra.mxu0 0
        %452 = vmatprep.subr.bf16.mxu0 0
        %453 = vmatpush1.bf16.msra.mxu0 0
        %454 = vmatprep.mubr.bf16.mxu0 0
        %455 = vmatmul.mubr.bf16.gmra.mrb[0].mxu0 %v420
        %v456 = vpop.f32.mrb[0].mxu0
        %v457 = vadd.f32 %v392, %v456
        %v458 = vpop.f32.mrb[0].mxu0
        %v459 = vpop.f32.mrb[0].mxu0
        %v460 = vadd.f32 %v392, %v459
        %v461 = vpop.f32.mrb[0].mxu0
        %462 = vdwg.mxu0
        %v463 = vmax.f32 %v457, 0.0
        %v464 = vmax.f32 %v460, 0.0
        %v465 = vpack.c.bf16 %v464, %v463
        %v466 = vld [vmem:[%s5] sm:$0xf]
        %v467 = vld [vmem:[%s5 + $0x4] sm:$0xf]
        %v468 = vld [vmem:[%s5 + $0x8] sm:$0xf]
        %v469 = vld [vmem:[%s5 + $0xc] sm:$0xf]
        %v470 = vld [vmem:[%s6] sm:$0x1]
        %v472 = vlaneseq
        %v473 = vshrl.u32 %v472, 7
        %v474 = vsub.s32 0, %v473
        %v475 = vrot.slane %v470, %v474
        %v481 = vunpack.c.l.b16 %v466
        %v482 = vunpack.c.l.b16 %v467
        %v483 = vunpack.c.l.b16 %v468
        %v484 = vunpack.c.l.b16 %v469
        %v485 = vpack.c.b16 %v482, %v481
        %v486 = vpack.c.b16 %v484, %v483
        %v490 = vsel %vm331, %v465, 0
        %492 = vmatprep.subr.bf16.mxu0 0
        %493 = vmatpush1.bf16.msra.mxu0 %v485
        %494 = vmatprep.subr.bf16.mxu0 0
        %495 = vmatpush1.bf16.msra.mxu0 %v486
        %496 = vmatprep.subr.bf16.mxu0 0
        %497 = vmatpush1.bf16.msra.mxu0 0
        %498 = vmatprep.subr.bf16.mxu0 0
        %499 = vmatpush1.bf16.msra.mxu0 0
        %500 = vmatprep.subr.bf16.mxu0 0
        %501 = vmatpush1.bf16.msra.mxu0 0
        %502 = vmatprep.subr.bf16.mxu0 0
        %503 = vmatpush1.bf16.msra.mxu0 0
        %504 = vmatprep.subr.bf16.mxu0 0
        %505 = vmatpush1.bf16.msra.mxu0 0
        %506 = vmatprep.subr.bf16.mxu0 0
        %507 = vmatpush1.bf16.msra.mxu0 0
        %508 = vmatprep.subr.bf16.mxu0 0
        %509 = vmatpush1.bf16.msra.mxu0 0
        %510 = vmatprep.subr.bf16.mxu0 0
        %511 = vmatpush1.bf16.msra.mxu0 0
        %512 = vmatprep.subr.bf16.mxu0 0
        %513 = vmatpush1.bf16.msra.mxu0 0
        %514 = vmatprep.subr.bf16.mxu0 0
        %515 = vmatpush1.bf16.msra.mxu0 0
        %516 = vmatprep.subr.bf16.mxu0 0
        %517 = vmatpush1.bf16.msra.mxu0 0
        %518 = vmatprep.subr.bf16.mxu0 0
        %519 = vmatpush1.bf16.msra.mxu0 0
        %520 = vmatprep.subr.bf16.mxu0 0
        %521 = vmatpush1.bf16.msra.mxu0 0
        %522 = vmatprep.subr.bf16.mxu0 0
        %523 = vmatpush1.bf16.msra.mxu0 0
        %524 = vmatprep.mubr.bf16.mxu0 0
        %525 = vmatmul.mubr.bf16.gmra.mrb[0].mxu0 %v490
        %v526 = vpop.f32.mrb[0].mxu0
        %v527 = vadd.f32 %v475, %v526
        %v528 = vpop.f32.mrb[0].mxu0
        %v529 = vpop.f32.mrb[0].mxu0
        %v530 = vadd.f32 %v475, %v529
        %v531 = vpop.f32.mrb[0].mxu0
        %532 = vdwg.mxu0
        %vm533 = vcmask 31744
        %534 = vst.msk [vmem:[%s280] sm:$0xff] %vm533, %v527
        %535 = vst.msk [vmem:[%s280 + $0x8] sm:$0xff] %vm533, %v530
        %s536 = sand.u32 %s178, 1
        %s537 = sand.u32 %s178, 1
        %s538 = smul.addr %s537, 16
        %s539 = scalar_lea.vmem [#allocation2], %s538
        // Predicated region
        $region49: #{tpu_custom_call.1} parent=47 // pred_check
          %p540 = pneg %p188
        $region50: #{tpu_custom_call.1} parent=47 // pred_check_branch
          %542 = sbr.rel (%p540) target = $region52
        $region51: #{tpu_custom_call.1} parent=47 // pred_region
          %s543 = smul.u32 2, %s18
          %s544 = ssub.s32 3, %s543
          %p545 = scmp.lt.s32.totalorder %s544, 2
          %s546 = scalar_select %p545, %s544, 2
          %s547 = smul.u32 128, %s546
          %p548 = scmp.ne.s32.totalorder 0, %s547
          %s549 = smul.addr %s543, 8
          %s550 = scalar_lea.vmem %s7, %s549
          // Predicated region
          $region53: #{tpu_custom_call.1} parent=51 // pred_check
            %p551 = pneg %p548
          $region54: #{tpu_custom_call.1} parent=51 // pred_check_branch
            %553 = sbr.rel (%p551) target = $region56
          $region55: #{tpu_custom_call.1} parent=51 // pred_region
            // Predicated region
            $region57: #{tpu_custom_call.1} parent=55 // pred_check
              _
            $region58: #{tpu_custom_call.1} parent=55 // pred_check_branch
              %555 = sbr.rel (0) target = $region60
            $region59: #{tpu_custom_call.1} parent=55 // pred_region
              // Predicated region
              $region79: #{tpu_custom_call.1} parent=59 // pred_check
                _
              $region80: #{tpu_custom_call.1} parent=59 // pred_check_branch
                %606 = sbr.rel (0) target = $region82
              $region81: #{tpu_custom_call.1} parent=59 // pred_region
                %s607 = sshrl.u32 %s546, 1
                // While loop
                $region83: #{tpu_custom_call.1} parent=81 // loop_pre_header
                  _
                $region84: #{tpu_custom_call.1} parent=81 // loop_header
                  %s609 = sphi 0, %s611
                  %p610 = scmp.ge.s32.totalorder %s609, %s607
                  %s614 = sphi 0, %s623
                  %s615 = sphi %s539, %s626
                  %s616 = sphi %s550, %s627
                $region85: #{tpu_custom_call.1} parent=81 // loop_header_branch
                  %613 = sbr.rel (%p610) target = $region89
                $region86: #{tpu_custom_call.1} parent=81 // loop_body
                  %v617 = vld [vmem:[%s615] sm:$0xff]
                  %618 = vst [vmem:[%s616] sm:$0xff] %v617
                  %v619 = vld [vmem:[%s615 + $0x8] sm:$0xff]
                  %620 = vst [vmem:[%s616 + $0x8] sm:$0xff] %v619
                  %s621 = sadd.s32 1, %s614
                  %p622 = scmp.ge.s32.totalorder %s621, %s607
                  %s623 = scalar_select %p622, 0, %s621
                  %s624 = smul.u32 %s623, 16
                  %s625 = smul.u32 %s623, 16
                  %s626 = scalar_lea.vmem %s539, %s624 [#allocation2]
                  %s627 = scalar_lea.vmem %s550, %s625
                $region87: #{tpu_custom_call.1} parent=81 // loop_footer
                  %s611 = sadd.s32 %s609, 1
                $region88: #{tpu_custom_call.1} parent=81 // loop_footer_branch
                  %608 = sbr.rel target = $region84
                $region89: #{tpu_custom_call.1} parent=81 // loop_exit
                  _
                %s628 = sshrl.u32 %s546, 1
                %s629 = sand.u32 %s546, 1
                %s630 = smul.u32 %s628, 2
                %s631 = smul.u32 8, %s630
                %s632 = scalar_lea.vmem %s539, %s631 [#allocation2]
                %s633 = smul.u32 8, %s630
                %s634 = scalar_lea.vmem %s550, %s633
                // While loop
                $region90: #{tpu_custom_call.1} parent=81 // loop_pre_header
                  _
                $region91: #{tpu_custom_call.1} parent=81 // loop_header
                  %s636 = sphi 0, %s638
                  %p637 = scmp.ge.s32.totalorder %s636, %s629
                  %s641 = sphi 0, %s648
                  %s642 = sphi %s632, %s651
                  %s643 = sphi %s634, %s652
                $region92: #{tpu_custom_call.1} parent=81 // loop_header_branch
                  %640 = sbr.rel (%p637) target = $region96
                $region93: #{tpu_custom_call.1} parent=81 // loop_body
                  %v644 = vld [vmem:[%s642] sm:$0xff]
                  %645 = vst [vmem:[%s643] sm:$0xff] %v644
                  %s646 = sadd.s32 1, %s641
                  %p647 = scmp.ge.s32.totalorder %s646, %s629
                  %s648 = scalar_select %p647, 0, %s646
                  %s649 = smul.u32 %s648, 8
                  %s650 = smul.u32 %s648, 8
                  %s651 = scalar_lea.vmem %s632, %s649 [#allocation2]
                  %s652 = scalar_lea.vmem %s634, %s650
                $region94: #{tpu_custom_call.1} parent=81 // loop_footer
                  %s638 = sadd.s32 %s636, 1
                $region95: #{tpu_custom_call.1} parent=81 // loop_footer_branch
                  %635 = sbr.rel target = $region91
                $region96: #{tpu_custom_call.1} parent=81 // loop_exit
                  _
              $region82: #{tpu_custom_call.1} parent=59 // pred_fallthru
                _
              // Predicated region
              $region97: #{tpu_custom_call.1} parent=59 // pred_check
                _
              $region98: #{tpu_custom_call.1} parent=59 // pred_check_branch
                %654 = sbr.rel target = $region100
              $region99: #{tpu_custom_call.1} parent=59 // pred_region
                _
              $region100: #{tpu_custom_call.1} parent=59 // pred_fallthru
                _
            $region60: #{tpu_custom_call.1} parent=55 // pred_fallthru
              _
            // Predicated region
            $region61: #{tpu_custom_call.1} parent=55 // pred_check
              _
            $region62: #{tpu_custom_call.1} parent=55 // pred_check_branch
              %557 = sbr.rel target = $region64
            $region63: #{tpu_custom_call.1} parent=55 // pred_region
              %s559 = sshrl.u32 %s546, 1
              // While loop
              $region65: #{tpu_custom_call.1} parent=63 // loop_pre_header
                _
              $region66: #{tpu_custom_call.1} parent=63 // loop_header
                %s561 = sphi 0, %s563
                %p562 = scmp.ge.s32.totalorder %s561, %s559
                %s566 = sphi 0, %s575
                %s567 = sphi %s539, %s578
                %s568 = sphi %s550, %s579
              $region67: #{tpu_custom_call.1} parent=63 // loop_header_branch
                %565 = sbr.rel (%p562) target = $region71
              $region68: #{tpu_custom_call.1} parent=63 // loop_body
                %v569 = vld [vmem:[%s567] sm:$0xff]
                %570 = vst [vmem:[%s568] sm:$0xff] %v569
                %v571 = vld [vmem:[%s567 + $0x8] sm:$0xff]
                %572 = vst [vmem:[%s568 + $0x8] sm:$0xff] %v571
                %s573 = sadd.s32 1, %s566
                %p574 = scmp.ge.s32.totalorder %s573, %s559
                %s575 = scalar_select %p574, 0, %s573
                %s576 = smul.u32 %s575, 16
                %s577 = smul.u32 %s575, 16
                %s578 = scalar_lea.vmem %s539, %s576 [#allocation2]
                %s579 = scalar_lea.vmem %s550, %s577
              $region69: #{tpu_custom_call.1} parent=63 // loop_footer
                %s563 = sadd.s32 %s561, 1
              $region70: #{tpu_custom_call.1} parent=63 // loop_footer_branch
                %560 = sbr.rel target = $region66
              $region71: #{tpu_custom_call.1} parent=63 // loop_exit
                _
              %s580 = sshrl.u32 %s546, 1
              %s581 = sand.u32 %s546, 1
              %s582 = smul.u32 %s580, 2
              %s583 = smul.u32 8, %s582
              %s584 = scalar_lea.vmem %s539, %s583 [#allocation2]
              %s585 = smul.u32 8, %s582
              %s586 = scalar_lea.vmem %s550, %s585
              // While loop
              $region72: #{tpu_custom_call.1} parent=63 // loop_pre_header
                _
              $region73: #{tpu_custom_call.1} parent=63 // loop_header
                %s588 = sphi 0, %s590
                %p589 = scmp.ge.s32.totalorder %s588, %s581
                %s593 = sphi 0, %s600
                %s594 = sphi %s584, %s603
                %s595 = sphi %s586, %s604
              $region74: #{tpu_custom_call.1} parent=63 // loop_header_branch
                %592 = sbr.rel (%p589) target = $region78
              $region75: #{tpu_custom_call.1} parent=63 // loop_body
                %v596 = vld [vmem:[%s594] sm:$0xff]
                %597 = vst [vmem:[%s595] sm:$0xff] %v596
                %s598 = sadd.s32 1, %s593
                %p599 = scmp.ge.s32.totalorder %s598, %s581
                %s600 = scalar_select %p599, 0, %s598
                %s601 = smul.u32 %s600, 8
                %s602 = smul.u32 %s600, 8
                %s603 = scalar_lea.vmem %s584, %s601 [#allocation2]
                %s604 = scalar_lea.vmem %s586, %s602
              $region76: #{tpu_custom_call.1} parent=63 // loop_footer
                %s590 = sadd.s32 %s588, 1
              $region77: #{tpu_custom_call.1} parent=63 // loop_footer_branch
                %587 = sbr.rel target = $region73
              $region78: #{tpu_custom_call.1} parent=63 // loop_exit
                _
            $region64: #{tpu_custom_call.1} parent=55 // pred_fallthru
              _
          $region56: #{tpu_custom_call.1} parent=51 // pred_fallthru
            _
          %655 = vnop
        $region52: #{tpu_custom_call.1} parent=47 // pred_fallthru
          _
      $region48: #{tpu_custom_call.1} parent=5 // pred_fallthru
        _
      %p656 = scmp.le.s32.totalorder 2, %s13
      // Predicated region
      $region101: #{tpu_custom_call.1} parent=5 // pred_check
        %p657 = pneg %p656
      $region102: #{tpu_custom_call.1} parent=5 // pred_check_branch
        %659 = sbr.rel (%p657) target = $region104
      $region103: #{tpu_custom_call.1} parent=5 // pred_region
        %s660 = ssub.s32 %s13, 2
        // Predicated region
        $region105: #{tpu_custom_call.1} parent=103 // pred_check
          %p661 = pneg %p194
        $region106: #{tpu_custom_call.1} parent=103 // pred_check_branch
          %663 = sbr.rel (%p661) target = $region108
        $region107: #{tpu_custom_call.1} parent=103 // pred_region
          %s664 = sand.u32 %s179, 1
          %s665 = sand.u32 %s179, 1
          %s666 = smul.addr %s665, 16
          %s667 = scalar_lea.vmem [#allocation2], %s666
        $region108: #{tpu_custom_call.1} parent=103 // pred_fallthru
          _
      $region104: #{tpu_custom_call.1} parent=5 // pred_fallthru
        _
    $region6: #{tpu_custom_call.1} parent=1 // loop_footer
      %s17 = sadd.s32 1, %s13
    $region7: #{tpu_custom_call.1} parent=1 // loop_footer_branch
      %12 = sbr.rel target = $region3
    $region8: #{tpu_custom_call.1} parent=1 // loop_exit
      _

</llo_original>
